<compile_context>
chip_gen: v7x
topology: tpu7x:2x2x1
jax: 0.10.0
libtpu: 0.0.40
codegen_flags: <defaults>
</compile_context>

<pallas_src>
import jax
import jax.numpy as jnp
from jax import lax
from jax.experimental import pallas as pl
from jax.experimental.pallas import tpu as pltpu

# ---- small, deterministic configuration (stands in for the real dims) -------
FEATURE_DIM = 32        # stands in for 2048 (inception_v3 feature dim)
PROJECTION_DIM = 64     # stands in for 1408 (tsn projection_dim)
HIDDEN_DIM = 32         # stands in for paligemma hidden_size (1408)
FH = FW = 4             # backbone-stub output spatial size -> HW = 16
HW = FH * FW
ATT_LANES = 128         # lane-dense width for the attention-map output
SEGMENT_SCALES = ((1, 1), (2, 2), (4, 4))
NUM_SCALES = len(SEGMENT_SCALES)
ORIGINAL_RATIO = 0.95
TSN_RATIO = 0.05
TK = FEATURE_DIM        # K tile of the TSN projection; TODO(synk): ~512 at production dims


# ---------------------------------------------------------------------------
# Fused kernel factory.
#   grid = (NK,)  over K tiles of proj_w ("arbitrary": accumulator residency)
#   k == 0      : backbone stub + attention + pool + per-scale mean -> comb_scr
#   every k     : acc_scr += combined[:, k-tile] @ proj_w[k-tile]   (bf16 MXU)
#   k == NK - 1 : + proj_b, feature_projection, mean/std norm, vision mixing
# ---------------------------------------------------------------------------
def _make_tsn_kernel(do_mix, seg_layout, b, hw, c):
    def kernel(*refs):
        if do_mix:
            (patch_ref, wb_ref, bb_ref, wa_ref, ba_ref,
             wp_ref, bp_ref, wf_ref, bf_ref, vis_ref,
             out_ref, att_ref, comb_scr, acc_scr) = refs
        else:
            (patch_ref, wb_ref, bb_ref, wa_ref, ba_ref,
             wp_ref, bp_ref, wf_ref, bf_ref,
             out_ref, att_ref, comb_scr, acc_scr) = refs
            vis_ref = None

        k = pl.program_id(0)
        nk = pl.num_programs(0)
        tk = wp_ref.shape[0]
        chunks_per_scale = c // tk          # static (wrapper asserts c % tk == 0)

        # ---------------- phase 1 (k == 0): per-segment elementwise stage ----
        @pl.when(k == 0)
        def _segments():
            acc_scr[...] = jnp.zeros_like(acc_scr)

            # TODO(synk): pretrained inception_v3 backbone (+ bilinear resize to
            # 224) replaced by a deterministic patch-pool + 1x1-conv + ReLU stub.
            wb = wb_ref[...]                 # [3, C]
            bb = bb_ref[...]                 # [1, C]
            # hoisted broadcast / padding constants (reused by every segment)
            lane_pad = jnp.zeros((b, att_ref.shape[-1] - hw), jnp.float32)

            for i, (seg_start, count) in enumerate(seg_layout):
                if count == 0:
                    # scale produced no valid segments -> zeros (matches torch)
                    for t in range(chunks_per_scale):
                        comb_scr[i * chunks_per_scale + t] = jnp.zeros((b, tk),
                                                                       jnp.float32)
                    continue

                wa_i = wa_ref[i:i + 1, :]    # [1, C]  SpatialAttention 1x1 conv
                ba_i = ba_ref[i:i + 1, :]    # [1, 1]

                def seg_body(j, acc_bc, seg_start=seg_start, wa_i=wa_i, ba_i=ba_i):
                    s = seg_start + j
                    p = patch_ref[s]         # [B, HW, 3]  (channels minor: the
                    # pixel value broadcasts along the C lanes with HW already on
                    # sublanes -> no in-kernel relayout; K=3 contraction is 3 VPU
                    # FMAs, not a 3/128-utilized MXU matmul)
                    feat = jnp.maximum(
                        p[..., 0:1] * wb[0:1, :]
                        + p[..., 1:2] * wb[1:2, :]
                        + p[..., 2:3] * wb[2:3, :] + bb, 0.0)      # [B, HW, C]
                    logits = jnp.sum(feat * wa_i, axis=-1, keepdims=True) + ba_i
                    att = jax.nn.sigmoid(logits)                   # [B, HW, 1]
                    # lane-dense attention-map store (padded to 128 lanes)
                    att_ref[s] = jnp.concatenate([att[..., 0], lane_pad], axis=-1)
                    # x * attention, adaptive_avg_pool2d((1,1)) -> [B, C]
                    return acc_bc + jnp.mean(feat * att, axis=1)

                ssum = lax.fori_loop(0, count, seg_body,
                                     jnp.zeros((b, c), jnp.float32))
                mean_feat = ssum * (1.0 / count)                   # per-scale mean
                for t in range(chunks_per_scale):
                    comb_scr[i * chunks_per_scale + t] = \
                        mean_feat[:, t * tk:(t + 1) * tk]

        # ---------------- phase 2: K-tiled TSN projection (bf16 MXU) ---------
        acc_scr[...] += jnp.dot(comb_scr[k].astype(jnp.bfloat16), wp_ref[...],
                                preferred_element_type=jnp.float32)

        # ---------------- phase 3 (k == last): finalize -----------------------
        @pl.when(k == nk - 1)
        def _finalize():
            tsn = acc_scr[...] + bp_ref[...]                       # [B, P]
            proj = jnp.dot(tsn.astype(jnp.bfloat16), wf_ref[...],
                           preferred_element_type=jnp.float32) + bf_ref[...]
            # global mean / unbiased std normalization (torch .mean()/.std(),
            # eps added to std); one scalar reciprocal, then broadcast multiply.
            n = proj.shape[0] * proj.shape[1]
            mean = jnp.sum(proj) * (1.0 / n)
            var = jnp.sum((proj - mean) ** 2) * (1.0 / (n - 1))
            inv_std = 1.0 / (jnp.sqrt(var) + 1e-6)
            norm = (proj - mean) * inv_std
            out_ref[0:b, :] = norm
            if do_mix:        # vision-tower mixing hook (seq_len == 1 path)
                out_ref[b:2 * b, :] = (ORIGINAL_RATIO * vis_ref[...]
                                       + TSN_RATIO * norm)

    return kernel


# ---------------------------------------------------------------------------
# Glue: segment extraction (mirrors the PyTorch slicing / skip-small logic)
# ---------------------------------------------------------------------------
def _extract_segment_patches(x_nchw, h0, h1, w0, w1):
    seg = x_nchw[:, :, h0:h1, w0:w1]
    bsz, cin, hs, ws = seg.shape
    # TODO(synk): F.interpolate(bilinear, 224) before the backbone is folded
    # into the patch average-pool of the backbone stub.
    seg = seg.reshape(bsz, cin, FH, hs // FH, FW, ws // FW).mean(axis=(3, 5))
    return seg.reshape(bsz, cin, FH * FW).transpose(0, 2, 1)       # [B, HW, 3]


def tsn_paligemma_forward(pixel_values, vision_tower_out, params):
    """Returns (combined_vision_output, normalized_tsn_features, attention_maps)."""
    b, cin, h, w = pixel_values.shape
    if h < 32 or w < 32:
        # TODO(synk): initial F.interpolate-to-224 branch for tiny inputs not implemented
        raise ValueError("input spatial size must be >= 32")

    seg_patches, seg_layout = [], []
    for hn, wn in SEGMENT_SCALES:
        h_size = max(1, h // hn)
        w_size = max(1, w // wn)
        seg_start, count = len(seg_patches), 0
        for hi in range(hn):
            for wi in range(wn):
                h0 = hi * h_size
                h1 = (hi + 1) * h_size if hi < hn - 1 else h
                w0 = wi * w_size
                w1 = (wi + 1) * w_size if wi < wn - 1 else w
                if (h1 - h0) < 32 or (w1 - w0) < 32:   # skip-small-segment rule
                    continue
                seg_patches.append(
                    _extract_segment_patches(pixel_values, h0, h1, w0, w1))
                count += 1
        seg_layout.append((seg_start, count))

    nseg = len(seg_patches)
    patches = jnp.stack(seg_patches, axis=0)            # [NSEG, B, HW, 3]

    seq_len = vision_tower_out.shape[1]
    do_mix = (seq_len == 1)

    k_total = NUM_SCALES * FEATURE_DIM
    assert FEATURE_DIM % TK == 0 and k_total % TK == 0
    nk = k_total // TK

    kernel = _make_tsn_kernel(do_mix, tuple(seg_layout), b, HW, FEATURE_DIM)

    inputs = [patches,
              params["backbone_w"], params["backbone_b"],
              params["att_w"], params["att_b"],
              params["proj_w"], params["proj_b"],
              params["feat_w"], params["feat_b"]]
    in_specs = [
        pl.BlockSpec(patches.shape, lambda k: (0, 0, 0, 0)),
        pl.BlockSpec((3, FEATURE_DIM), lambda k: (0, 0)),
        pl.BlockSpec((1, FEATURE_DIM), lambda k: (0, 0)),
        pl.BlockSpec((NUM_SCALES, FEATURE_DIM), lambda k: (0, 0)),
        pl.BlockSpec((NUM_SCALES, 1), lambda k: (0, 0)),
        # bf16 proj_w streamed K-tile by K-tile (double-buffered by BlockSpec)
        pl.BlockSpec((TK, PROJECTION_DIM), lambda k: (k, 0)),
        pl.BlockSpec((1, PROJECTION_DIM), lambda k: (0, 0)),
        pl.BlockSpec((PROJECTION_DIM, HIDDEN_DIM), lambda k: (0, 0)),
        pl.BlockSpec((1, HIDDEN_DIM), lambda k: (0, 0)),
    ]
    if do_mix:
        inputs.append(vision_tower_out[:, 0, :])         # [B, H]
        in_specs.append(pl.BlockSpec((b, HIDDEN_DIM), lambda k: (0, 0)))

    out_rows = (2 if do_mix else 1) * b                  # norm (+ mixed) stacked
    out_shape = [
        jax.ShapeDtypeStruct((out_rows, HIDDEN_DIM), jnp.float32),
        jax.ShapeDtypeStruct((nseg, b, ATT_LANES), jnp.float32),
    ]
    out_specs = [
        pl.BlockSpec((out_rows, HIDDEN_DIM), lambda k: (0, 0)),
        pl.BlockSpec((nseg, b, ATT_LANES), lambda k: (0, 0, 0)),
    ]

    flops = (2 * nseg * b * HW * 3 * FEATURE_DIM          # backbone-stub FMAs
             + 4 * nseg * b * HW * FEATURE_DIM            # attention dot + weighting
             + 2 * b * k_total * PROJECTION_DIM
             + 2 * b * PROJECTION_DIM * HIDDEN_DIM
             + 8 * b * HIDDEN_DIM)
    bytes_in = (4 * sum(int(x.size) for x in inputs if x.dtype == jnp.float32)
                + 2 * sum(int(x.size) for x in inputs if x.dtype == jnp.bfloat16))
    bytes_out = 4 * (out_rows * HIDDEN_DIM + nseg * b * ATT_LANES)

    out_feats, att_pad = pl.pallas_call(
        kernel,
        grid_spec=pltpu.PrefetchScalarGridSpec(
            num_scalar_prefetch=0,
            grid=(nk,),
            in_specs=in_specs,
            out_specs=out_specs,
            scratch_shapes=[
                pltpu.VMEM((nk, b, TK), jnp.float32),          # combined features (K-chunked)
                pltpu.VMEM((b, PROJECTION_DIM), jnp.float32),  # projection accumulator
            ]),
        out_shape=out_shape,
        compiler_params=pltpu.CompilerParams(
            dimension_semantics=("arbitrary",),                # K reduction axis
            vmem_limit_bytes=48 * 1024 * 1024),
        cost_estimate=pl.CostEstimate(
            flops=flops,
            transcendentals=nseg * b * HW,                     # sigmoid
            bytes_accessed=bytes_in + bytes_out),
    )(*inputs)

    tsn_norm = out_feats[0:b]                                  # [B, H]
    att_maps = att_pad[:, :, :HW]                              # strip lane padding

    # TODO(synk): the PaliGemma model itself (vision tower + LM, generate()) is
    # untranslatable; we take its vision-tower output as an input tensor and
    # only reproduce the TSN feature-mixing hook.
    if do_mix:
        combined_out = out_feats[b:2 * b][:, None, :]          # [B, 1, H]
    else:
        combined_out = vision_tower_out                        # seq_len > 1: unchanged
    return combined_out, tsn_norm, att_maps


# ---------------------------------------------------------------------------
# deterministic parameter init
# ---------------------------------------------------------------------------
def init_params(key):
    ks = jax.random.split(key, 8)
    return {
        "backbone_w": jax.random.normal(ks[0], (3, FEATURE_DIM), jnp.float32) * 0.1,
        "backbone_b": jax.random.normal(ks[1], (1, FEATURE_DIM), jnp.float32) * 0.01,
        "att_w": jax.random.normal(ks[2], (NUM_SCALES, FEATURE_DIM), jnp.float32) * 0.1,
        "att_b": jax.random.normal(ks[3], (NUM_SCALES, 1), jnp.float32) * 0.01,
        # HBM-resident matmul weights stored bf16 (halved DMA bytes; activations
        # are cast to bf16 only at the MXU boundary, accumulation stays f32).
        "proj_w": (jax.random.normal(ks[4], (NUM_SCALES * FEATURE_DIM, PROJECTION_DIM),
                                     jnp.float32) * 0.05).astype(jnp.bfloat16),
        "proj_b": jax.random.normal(ks[5], (1, PROJECTION_DIM), jnp.float32) * 0.01,
        "feat_w": (jax.random.normal(ks[6], (PROJECTION_DIM, HIDDEN_DIM),
                                     jnp.float32) * 0.05).astype(jnp.bfloat16),
        "feat_b": jax.random.normal(ks[7], (1, HIDDEN_DIM), jnp.float32) * 0.01,
    }


if __name__ == "__main__":
    key = jax.random.PRNGKey(0)
    k_img, k_vis, k_par = jax.random.split(key, 3)

    # pixel_values in PyTorch NCHW layout; 64x64 -> scale (4,4) segments are
    # 16x16 (< 32) and are skipped, exercising the zero-feature path.
    pixel_values = jax.random.normal(k_img, (2, 3, 64, 64), jnp.float32)
    # synthetic PaliGemma vision-tower output [B, seq_len=1, hidden_dim]
    vision_tower_out = jax.random.normal(k_vis, (2, 1, HIDDEN_DIM), jnp.float32)
    params = init_params(k_par)

    combined_out, tsn_norm, att_maps = tsn_paligemma_forward(
        pixel_values, vision_tower_out, params)
    jax.block_until_ready((combined_out, tsn_norm, att_maps))

    assert combined_out.shape == (2, 1, HIDDEN_DIM)
    assert tsn_norm.shape == (2, HIDDEN_DIM)
    assert att_maps.shape == (5, 2, FH * FW)   # 1 + 4 + 0 valid segments
    print("KERNEL_OK")
</pallas_src>

<mosaic_0001>
module attributes {stable_mosaic.version = 11 : i64} {
  func.func @kernel(%arg0: i32, %arg1: memref<5x2x16x3xf32, #tpu.memory_space<vmem>>, %arg2: memref<3x32xf32, #tpu.memory_space<vmem>>, %arg3: memref<1x32xf32, #tpu.memory_space<vmem>>, %arg4: memref<3x32xf32, #tpu.memory_space<vmem>>, %arg5: memref<3x1xf32, #tpu.memory_space<vmem>>, %arg6: memref<32x64xbf16, #tpu.memory_space<vmem>>, %arg7: memref<1x64xf32, #tpu.memory_space<vmem>>, %arg8: memref<64x32xbf16, #tpu.memory_space<vmem>>, %arg9: memref<1x32xf32, #tpu.memory_space<vmem>>, %arg10: memref<2x32xf32, #tpu.memory_space<vmem>>, %arg11: memref<4x32xf32, #tpu.memory_space<vmem>>, %arg12: memref<5x2x128xf32, #tpu.memory_space<vmem>>, %arg13: memref<3x2x32xf32, #tpu.memory_space<vmem>>, %arg14: memref<2x64xf32, #tpu.memory_space<vmem>>) attributes {dimension_semantics = [#tpu.dimension_semantics<arbitrary>], iteration_bounds = array<i64: 3>, scalar_prefetch = 0 : i64, scratch_operands = 2 : i64, tpu.core_type = #tpu.core_type<tc>, window_params = [{pipeline_mode = #tpu.pipeline_mode<synchronous>, transform_indices = @transform_0, window_bounds = array<i64: 5, 2, 16, 3>}, {pipeline_mode = #tpu.pipeline_mode<synchronous>, transform_indices = @transform_1, window_bounds = array<i64: 3, 32>}, {pipeline_mode = #tpu.pipeline_mode<synchronous>, transform_indices = @transform_2, window_bounds = array<i64: 1, 32>}, {pipeline_mode = #tpu.pipeline_mode<synchronous>, transform_indices = @transform_3, window_bounds = array<i64: 3, 32>}, {pipeline_mode = #tpu.pipeline_mode<synchronous>, transform_indices = @transform_4, window_bounds = array<i64: 3, 1>}, {transform_indices = @transform_5, window_bounds = array<i64: 32, 64>}, {pipeline_mode = #tpu.pipeline_mode<synchronous>, transform_indices = @transform_6, window_bounds = array<i64: 1, 64>}, {pipeline_mode = #tpu.pipeline_mode<synchronous>, transform_indices = @transform_7, window_bounds = array<i64: 64, 32>}, {pipeline_mode = #tpu.pipeline_mode<synchronous>, transform_indices = @transform_8, window_bounds = array<i64: 1, 32>}, {pipeline_mode = #tpu.pipeline_mode<synchronous>, transform_indices = @transform_9, window_bounds = array<i64: 2, 32>}, {pipeline_mode = #tpu.pipeline_mode<synchronous>, transform_indices = @transform_10, window_bounds = array<i64: 4, 32>}, {pipeline_mode = #tpu.pipeline_mode<synchronous>, transform_indices = @transform_11, window_bounds = array<i64: 5, 2, 128>}]} {
    %c0_i32 = arith.constant 0 : i32
    %0 = arith.cmpi eq, %arg0, %c0_i32 : i32
    %1 = arith.extui %0 : i1 to i32
    %c0_i32_0 = arith.constant 0 : i32
    %2 = arith.cmpi ne, %1, %c0_i32_0 : i32
    scf.if %2 {
      %cst_9 = arith.constant 0.000000e+00 : f32
      %15 = vector.broadcast %cst_9 : f32 to vector<2x64xf32>
      %c0_10 = arith.constant 0 : index
      %c0_11 = arith.constant 0 : index
      %16 = vector.load %arg14[%c0_10, %c0_11] : memref<2x64xf32, #tpu.memory_space<vmem>>, vector<2x64xf32>
      tpu.vector_store %arg14[%c0_10, %c0_11], %15 {strides = array<i32>} : memref<2x64xf32, #tpu.memory_space<vmem>>, vector<2x64xf32>,
      %c0_12 = arith.constant 0 : index
      %c0_13 = arith.constant 0 : index
      %17 = vector.load %arg2[%c0_12, %c0_13] : memref<3x32xf32, #tpu.memory_space<vmem>>, vector<3x32xf32>
      %c0_14 = arith.constant 0 : index
      %c0_15 = arith.constant 0 : index
      %18 = vector.load %arg3[%c0_14, %c0_15] : memref<1x32xf32, #tpu.memory_space<vmem>>, vector<1x32xf32>
      %cst_16 = arith.constant 0.000000e+00 : f32
      %19 = vector.broadcast %cst_16 : f32 to vector<2x112xf32>
      %c0_17 = arith.constant 0 : index
      %c0_18 = arith.constant 0 : index
      %20 = vector.load %arg4[%c0_17, %c0_18] : memref<3x32xf32, #tpu.memory_space<vmem>>, vector<1x32xf32>
      %c0_19 = arith.constant 0 : index
      %c0_20 = arith.constant 0 : index
      %21 = vector.load %arg5[%c0_19, %c0_20] : memref<3x1xf32, #tpu.memory_space<vmem>>, vector<1x1xf32>
      %cst_21 = arith.constant 0.000000e+00 : f32
      %22 = vector.broadcast %cst_21 : f32 to vector<2x32xf32>
      %c0_i32_22 = arith.constant 0 : i32
      %c0_i32_23 = arith.constant 0 : i32
      %23 = arith.addi %c0_i32_23, %c0_i32_22 : i32
      %24 = arith.index_cast %23 : i32 to index
      %c0_24 = arith.constant 0 : index
      %c0_25 = arith.constant 0 : index
      %c0_26 = arith.constant 0 : index
      %25 = vector.load %arg1[%24, %c0_24, %c0_25, %c0_26] : memref<5x2x16x3xf32, #tpu.memory_space<vmem>>, vector<1x2x16x3xf32>
      %26 = vector.shape_cast %25 : vector<1x2x16x3xf32> to vector<2x16x3xf32>
      %27 = vector.extract_strided_slice %26 {offsets = [0, 0, 0], sizes = [2, 16, 1], strides = [1, 1, 1]} : vector<2x16x3xf32> to vector<2x16x1xf32>
      %28 = vector.extract_strided_slice %17 {offsets = [0, 0], sizes = [1, 32], strides = [1, 1]} : vector<3x32xf32> to vector<1x32xf32>
      %29 = vector.shape_cast %28 : vector<1x32xf32> to vector<1x1x32xf32>
      %30 = vector.broadcast %27 : vector<2x16x1xf32> to vector<2x16x32xf32>
      %31 = vector.broadcast %29 : vector<1x1x32xf32> to vector<2x16x32xf32>
      %32 = arith.mulf %30, %31 : vector<2x16x32xf32>
      %33 = vector.extract_strided_slice %26 {offsets = [0, 0, 1], sizes = [2, 16, 1], strides = [1, 1, 1]} : vector<2x16x3xf32> to vector<2x16x1xf32>
      %34 = vector.extract_strided_slice %17 {offsets = [1, 0], sizes = [1, 32], strides = [1, 1]} : vector<3x32xf32> to vector<1x32xf32>
      %35 = vector.shape_cast %34 : vector<1x32xf32> to vector<1x1x32xf32>
      %36 = vector.broadcast %33 : vector<2x16x1xf32> to vector<2x16x32xf32>
      %37 = vector.broadcast %35 : vector<1x1x32xf32> to vector<2x16x32xf32>
      %38 = arith.mulf %36, %37 : vector<2x16x32xf32>
      %39 = arith.addf %32, %38 : vector<2x16x32xf32>
      %40 = vector.extract_strided_slice %26 {offsets = [0, 0, 2], sizes = [2, 16, 1], strides = [1, 1, 1]} : vector<2x16x3xf32> to vector<2x16x1xf32>
      %41 = vector.extract_strided_slice %17 {offsets = [2, 0], sizes = [1, 32], strides = [1, 1]} : vector<3x32xf32> to vector<1x32xf32>
      %42 = vector.shape_cast %41 : vector<1x32xf32> to vector<1x1x32xf32>
      %43 = vector.broadcast %40 : vector<2x16x1xf32> to vector<2x16x32xf32>
      %44 = vector.broadcast %42 : vector<1x1x32xf32> to vector<2x16x32xf32>
      %45 = arith.mulf %43, %44 : vector<2x16x32xf32>
      %46 = arith.addf %39, %45 : vector<2x16x32xf32>
      %47 = vector.shape_cast %18 : vector<1x32xf32> to vector<1x1x32xf32>
      %48 = vector.broadcast %47 : vector<1x1x32xf32> to vector<2x16x32xf32>
      %49 = arith.addf %46, %48 : vector<2x16x32xf32>
      %cst_27 = arith.constant 0.000000e+00 : f32
      %50 = vector.broadcast %cst_27 : f32 to vector<2x16x32xf32>
      %51 = arith.maximumf %49, %50 : vector<2x16x32xf32>
      %52 = vector.shape_cast %20 : vector<1x32xf32> to vector<1x1x32xf32>
      %53 = vector.broadcast %52 : vector<1x1x32xf32> to vector<2x16x32xf32>
      %54 = arith.mulf %51, %53 : vector<2x16x32xf32>
      %cst_28 = arith.constant dense<0.000000e+00> : vector<2x16xf32>
      %55 = vector.multi_reduction <add>, %54, %cst_28 [2] : vector<2x16x32xf32> to vector<2x16xf32>
      %56 = vector.shape_cast %55 : vector<2x16xf32> to vector<2x16x1xf32>
      %57 = vector.shape_cast %21 : vector<1x1xf32> to vector<1x1x1xf32>
      %58 = vector.broadcast %57 : vector<1x1x1xf32> to vector<2x16x1xf32>
      %59 = arith.addf %56, %58 : vector<2x16x1xf32>
      %60 = arith.negf %59 : vector<2x16x1xf32>
      %61 = math.exp %60 : vector<2x16x1xf32>
      %cst_29 = arith.constant 1.000000e+00 : f32
      %62 = vector.broadcast %cst_29 : f32 to vector<2x16x1xf32>
      %63 = arith.addf %62, %61 : vector<2x16x1xf32>
      %64 = arith.divf %62, %63 : vector<2x16x1xf32>
      %65 = vector.shape_cast %64 : vector<2x16x1xf32> to vector<2x16xf32>
      %66 = tpu.concatenate %65, %19 in 1 : vector<2x16xf32>, vector<2x112xf32> -> vector<2x128xf32>
      %67 = arith.index_cast %23 : i32 to index
      %c0_30 = arith.constant 0 : index
      %c0_31 = arith.constant 0 : index
      %68 = vector.load %arg12[%67, %c0_30, %c0_31] : memref<5x2x128xf32, #tpu.memory_space<vmem>>, vector<1x2x128xf32>
      %69 = vector.shape_cast %68 : vector<1x2x128xf32> to vector<2x128xf32>
      %70 = vector.shape_cast %66 : vector<2x128xf32> to vector<1x2x128xf32>
      tpu.vector_store %arg12[%67, %c0_30, %c0_31], %70 {strides = array<i32>} : memref<5x2x128xf32, #tpu.memory_space<vmem>>, vector<1x2x128xf32>,
      %71 = vector.broadcast %64 : vector<2x16x1xf32> to vector<2x16x32xf32>
      %72 = arith.mulf %51, %71 : vector<2x16x32xf32>
      %cst_32 = arith.constant dense<0.000000e+00> : vector<2x32xf32>
      %73 = vector.multi_reduction <add>, %72, %cst_32 [1] : vector<2x16x32xf32> to vector<2x32xf32>
      %cst_33 = arith.constant 1.600000e+01 : f32
      %74 = vector.broadcast %cst_33 : f32 to vector<2x32xf32>
      %75 = arith.divf %73, %74 : vector<2x32xf32>
      %76 = arith.addf %22, %75 : vector<2x32xf32>
      %c1_i32 = arith.constant 1 : i32
      %cst_34 = arith.constant 1.000000e+00 : f32
      %77 = vector.broadcast %cst_34 : f32 to vector<2x32xf32>
      %78 = arith.mulf %76, %77 : vector<2x32xf32>
      %c0_35 = arith.constant 0 : index
      %c0_36 = arith.constant 0 : index
      %c0_37 = arith.constant 0 : index
      %79 = vector.load %arg13[%c0_35, %c0_36, %c0_37] : memref<3x2x32xf32, #tpu.memory_space<vmem>>, vector<1x2x32xf32>
      %80 = vector.shape_cast %79 : vector<1x2x32xf32> to vector<2x32xf32>
      %81 = vector.shape_cast %78 : vector<2x32xf32> to vector<1x2x32xf32>
      tpu.vector_store %arg13[%c0_35, %c0_36, %c0_37], %81 {strides = array<i32>} : memref<3x2x32xf32, #tpu.memory_space<vmem>>, vector<1x2x32xf32>,
      %c1 = arith.constant 1 : index
      %c0_38 = arith.constant 0 : index
      %82 = vector.load %arg4[%c1, %c0_38] : memref<3x32xf32, #tpu.memory_space<vmem>>, vector<1x32xf32>
      %c1_39 = arith.constant 1 : index
      %c0_40 = arith.constant 0 : index
      %83 = vector.load %arg5[%c1_39, %c0_40] : memref<3x1xf32, #tpu.memory_space<vmem>>, vector<1x1xf32>
      %cst_41 = arith.constant 0.000000e+00 : f32
      %84 = vector.broadcast %cst_41 : f32 to vector<2x32xf32>
      %c0_i32_42 = arith.constant 0 : i32
      %c4_i32 = arith.constant 4 : i32
      %85 = arith.addi %c0_i32_42, %c4_i32 : i32
      %c1_i32_43 = arith.constant 1 : i32
      %86 = scf.for %arg15 = %c0_i32_42 to %85 step %c1_i32_43 iter_args(%arg16 = %84) -> (vector<2x32xf32>)  : i32 {
        %c1_i32_52 = arith.constant 1 : i32
        %96 = arith.addi %c1_i32_52, %arg15 : i32
        %97 = arith.index_cast %96 : i32 to index
        %c0_53 = arith.constant 0 : index
        %c0_54 = arith.constant 0 : index
        %c0_55 = arith.constant 0 : index
        %98 = vector.load %arg1[%97, %c0_53, %c0_54, %c0_55] : memref<5x2x16x3xf32, #tpu.memory_space<vmem>>, vector<1x2x16x3xf32>
        %99 = vector.shape_cast %98 : vector<1x2x16x3xf32> to vector<2x16x3xf32>
        %100 = vector.extract_strided_slice %99 {offsets = [0, 0, 0], sizes = [2, 16, 1], strides = [1, 1, 1]} : vector<2x16x3xf32> to vector<2x16x1xf32>
        %101 = vector.extract_strided_slice %17 {offsets = [0, 0], sizes = [1, 32], strides = [1, 1]} : vector<3x32xf32> to vector<1x32xf32>
        %102 = vector.shape_cast %101 : vector<1x32xf32> to vector<1x1x32xf32>
        %103 = vector.broadcast %100 : vector<2x16x1xf32> to vector<2x16x32xf32>
        %104 = vector.broadcast %102 : vector<1x1x32xf32> to vector<2x16x32xf32>
        %105 = arith.mulf %103, %104 : vector<2x16x32xf32>
        %106 = vector.extract_strided_slice %99 {offsets = [0, 0, 1], sizes = [2, 16, 1], strides = [1, 1, 1]} : vector<2x16x3xf32> to vector<2x16x1xf32>
        %107 = vector.extract_strided_slice %17 {offsets = [1, 0], sizes = [1, 32], strides = [1, 1]} : vector<3x32xf32> to vector<1x32xf32>
        %108 = vector.shape_cast %107 : vector<1x32xf32> to vector<1x1x32xf32>
        %109 = vector.broadcast %106 : vector<2x16x1xf32> to vector<2x16x32xf32>
        %110 = vector.broadcast %108 : vector<1x1x32xf32> to vector<2x16x32xf32>
        %111 = arith.mulf %109, %110 : vector<2x16x32xf32>
        %112 = arith.addf %105, %111 : vector<2x16x32xf32>
        %113 = vector.extract_strided_slice %99 {offsets = [0, 0, 2], sizes = [2, 16, 1], strides = [1, 1, 1]} : vector<2x16x3xf32> to vector<2x16x1xf32>
        %114 = vector.extract_strided_slice %17 {offsets = [2, 0], sizes = [1, 32], strides = [1, 1]} : vector<3x32xf32> to vector<1x32xf32>
        %115 = vector.shape_cast %114 : vector<1x32xf32> to vector<1x1x32xf32>
        %116 = vector.broadcast %113 : vector<2x16x1xf32> to vector<2x16x32xf32>
        %117 = vector.broadcast %115 : vector<1x1x32xf32> to vector<2x16x32xf32>
        %118 = arith.mulf %116, %117 : vector<2x16x32xf32>
        %119 = arith.addf %112, %118 : vector<2x16x32xf32>
        %120 = vector.shape_cast %18 : vector<1x32xf32> to vector<1x1x32xf32>
        %121 = vector.broadcast %120 : vector<1x1x32xf32> to vector<2x16x32xf32>
        %122 = arith.addf %119, %121 : vector<2x16x32xf32>
        %cst_56 = arith.constant 0.000000e+00 : f32
        %123 = vector.broadcast %cst_56 : f32 to vector<2x16x32xf32>
        %124 = arith.maximumf %122, %123 : vector<2x16x32xf32>
        %125 = vector.shape_cast %82 : vector<1x32xf32> to vector<1x1x32xf32>
        %126 = vector.broadcast %125 : vector<1x1x32xf32> to vector<2x16x32xf32>
        %127 = arith.mulf %124, %126 : vector<2x16x32xf32>
        %cst_57 = arith.constant dense<0.000000e+00> : vector<2x16xf32>
        %128 = vector.multi_reduction <add>, %127, %cst_57 [2] : vector<2x16x32xf32> to vector<2x16xf32>
        %129 = vector.shape_cast %128 : vector<2x16xf32> to vector<2x16x1xf32>
        %130 = vector.shape_cast %83 : vector<1x1xf32> to vector<1x1x1xf32>
        %131 = vector.broadcast %130 : vector<1x1x1xf32> to vector<2x16x1xf32>
        %132 = arith.addf %129, %131 : vector<2x16x1xf32>
        %133 = arith.negf %132 : vector<2x16x1xf32>
        %134 = math.exp %133 : vector<2x16x1xf32>
        %cst_58 = arith.constant 1.000000e+00 : f32
        %135 = vector.broadcast %cst_58 : f32 to vector<2x16x1xf32>
        %136 = arith.addf %135, %134 : vector<2x16x1xf32>
        %137 = arith.divf %135, %136 : vector<2x16x1xf32>
        %138 = vector.shape_cast %137 : vector<2x16x1xf32> to vector<2x16xf32>
        %139 = tpu.concatenate %138, %19 in 1 : vector<2x16xf32>, vector<2x112xf32> -> vector<2x128xf32>
        %140 = arith.index_cast %96 : i32 to index
        %c0_59 = arith.constant 0 : index
        %c0_60 = arith.constant 0 : index
        %141 = vector.load %arg12[%140, %c0_59, %c0_60] : memref<5x2x128xf32, #tpu.memory_space<vmem>>, vector<1x2x128xf32>
        %142 = vector.shape_cast %141 : vector<1x2x128xf32> to vector<2x128xf32>
        %143 = vector.shape_cast %139 : vector<2x128xf32> to vector<1x2x128xf32>
        tpu.vector_store %arg12[%140, %c0_59, %c0_60], %143 {strides = array<i32>} : memref<5x2x128xf32, #tpu.memory_space<vmem>>, vector<1x2x128xf32>,
        %144 = vector.broadcast %137 : vector<2x16x1xf32> to vector<2x16x32xf32>
        %145 = arith.mulf %124, %144 : vector<2x16x32xf32>
        %cst_61 = arith.constant dense<0.000000e+00> : vector<2x32xf32>
        %146 = vector.multi_reduction <add>, %145, %cst_61 [1] : vector<2x16x32xf32> to vector<2x32xf32>
        %cst_62 = arith.constant 1.600000e+01 : f32
        %147 = vector.broadcast %cst_62 : f32 to vector<2x32xf32>
        %148 = arith.divf %146, %147 : vector<2x32xf32>
        %149 = arith.addf %arg16, %148 : vector<2x32xf32>
        scf.yield %149 : vector<2x32xf32>
      }
      %c4_i32_44 = arith.constant 4 : i32
      %cst_45 = arith.constant 2.500000e-01 : f32
      %87 = vector.broadcast %cst_45 : f32 to vector<2x32xf32>
      %88 = arith.mulf %86, %87 : vector<2x32xf32>
      %c1_46 = arith.constant 1 : index
      %c0_47 = arith.constant 0 : index
      %c0_48 = arith.constant 0 : index
      %89 = vector.load %arg13[%c1_46, %c0_47, %c0_48] : memref<3x2x32xf32, #tpu.memory_space<vmem>>, vector<1x2x32xf32>
      %90 = vector.shape_cast %89 : vector<1x2x32xf32> to vector<2x32xf32>
      %91 = vector.shape_cast %88 : vector<2x32xf32> to vector<1x2x32xf32>
      tpu.vector_store %arg13[%c1_46, %c0_47, %c0_48], %91 {strides = array<i32>} : memref<3x2x32xf32, #tpu.memory_space<vmem>>, vector<1x2x32xf32>,
      %cst_49 = arith.constant 0.000000e+00 : f32
      %92 = vector.broadcast %cst_49 : f32 to vector<2x32xf32>
      %c2 = arith.constant 2 : index
      %c0_50 = arith.constant 0 : index
      %c0_51 = arith.constant 0 : index
      %93 = vector.load %arg13[%c2, %c0_50, %c0_51] : memref<3x2x32xf32, #tpu.memory_space<vmem>>, vector<1x2x32xf32>
      %94 = vector.shape_cast %93 : vector<1x2x32xf32> to vector<2x32xf32>
      %95 = vector.shape_cast %92 : vector<2x32xf32> to vector<1x2x32xf32>
      tpu.vector_store %arg13[%c2, %c0_50, %c0_51], %95 {strides = array<i32>} : memref<3x2x32xf32, #tpu.memory_space<vmem>>, vector<1x2x32xf32>,
    } else {
    }
    %c0 = arith.constant 0 : index
    %c0_1 = arith.constant 0 : index
    %3 = vector.load %arg14[%c0, %c0_1] : memref<2x64xf32, #tpu.memory_space<vmem>>, vector<2x64xf32>
    %4 = arith.index_cast %arg0 : i32 to index
    %c0_2 = arith.constant 0 : index
    %c0_3 = arith.constant 0 : index
    %5 = vector.load %arg13[%4, %c0_2, %c0_3] : memref<3x2x32xf32, #tpu.memory_space<vmem>>, vector<1x2x32xf32>
    %6 = vector.shape_cast %5 : vector<1x2x32xf32> to vector<2x32xf32>
    %7 = arith.truncf %6 : vector<2x32xf32> to vector<2x32xbf16>
    %c0_4 = arith.constant 0 : index
    %c0_5 = arith.constant 0 : index
    %8 = vector.load %arg6[%c0_4, %c0_5] : memref<32x64xbf16, #tpu.memory_space<vmem>>, vector<32x64xbf16>
    %cst = arith.constant dense<0.000000e+00> : vector<2x64xf32>
    %9 = tpu.matmul %7, %8, %cst {dimension_numbers = #tpu.dot_dimension_numbers<[1], [0], [0], [1], [0, 0, 1, 1], [], []>} : vector<2x32xbf16>, vector<32x64xbf16>, vector<2x64xf32> -> vector<2x64xf32>
    %10 = arith.addf %3, %9 : vector<2x64xf32>
    %c0_6 = arith.constant 0 : index
    %c0_7 = arith.constant 0 : index
    %11 = vector.load %arg14[%c0_6, %c0_7] : memref<2x64xf32, #tpu.memory_space<vmem>>, vector<2x64xf32>
    tpu.vector_store %arg14[%c0_6, %c0_7], %10 {strides = array<i32>} : memref<2x64xf32, #tpu.memory_space<vmem>>, vector<2x64xf32>,
    %c2_i32 = arith.constant 2 : i32
    %12 = arith.cmpi eq, %arg0, %c2_i32 : i32
    %13 = arith.extui %12 : i1 to i32
    %c0_i32_8 = arith.constant 0 : i32
    %14 = arith.cmpi ne, %13, %c0_i32_8 : i32
    scf.if %14 {
      %c0_9 = arith.constant 0 : index
      %c0_10 = arith.constant 0 : index
      %15 = vector.load %arg14[%c0_9, %c0_10] : memref<2x64xf32, #tpu.memory_space<vmem>>, vector<2x64xf32>
      %c0_11 = arith.constant 0 : index
      %c0_12 = arith.constant 0 : index
      %16 = vector.load %arg7[%c0_11, %c0_12] : memref<1x64xf32, #tpu.memory_space<vmem>>, vector<1x64xf32>
      %17 = vector.broadcast %16 : vector<1x64xf32> to vector<2x64xf32>
      %18 = arith.addf %15, %17 : vector<2x64xf32>
      %19 = arith.truncf %18 : vector<2x64xf32> to vector<2x64xbf16>
      %c0_13 = arith.constant 0 : index
      %c0_14 = arith.constant 0 : index
      %20 = vector.load %arg8[%c0_13, %c0_14] : memref<64x32xbf16, #tpu.memory_space<vmem>>, vector<64x32xbf16>
      %cst_15 = arith.constant dense<0.000000e+00> : vector<2x32xf32>
      %21 = tpu.matmul %19, %20, %cst_15 {dimension_numbers = #tpu.dot_dimension_numbers<[1], [0], [0], [1], [0, 0, 1, 1], [], []>} : vector<2x64xbf16>, vector<64x32xbf16>, vector<2x32xf32> -> vector<2x32xf32>
      %c0_16 = arith.constant 0 : index
      %c0_17 = arith.constant 0 : index
      %22 = vector.load %arg9[%c0_16, %c0_17] : memref<1x32xf32, #tpu.memory_space<vmem>>, vector<1x32xf32>
      %23 = vector.broadcast %22 : vector<1x32xf32> to vector<2x32xf32>
      %24 = arith.addf %21, %23 : vector<2x32xf32>
      %25 = vector.shape_cast %24 : vector<2x32xf32> to vector<1x2x32xf32>
      %cst_18 = arith.constant dense<0.000000e+00> : vector<1xf32>
      %26 = vector.multi_reduction <add>, %25, %cst_18 [1, 2] : vector<1x2x32xf32> to vector<1xf32>
      %27 = vector.shape_cast %26 : vector<1xf32> to vector<1x1x1xf32>
      %28 = vector.extract %27[0, 0, 0] : f32 from vector<1x1x1xf32>
      %cst_19 = arith.constant 1.562500e-02 : f32
      %29 = arith.mulf %28, %cst_19 : f32
      %30 = vector.broadcast %29 : f32 to vector<2x32xf32>
      %31 = arith.subf %24, %30 : vector<2x32xf32>
      %32 = arith.mulf %31, %31 : vector<2x32xf32>
      %33 = vector.shape_cast %32 : vector<2x32xf32> to vector<1x2x32xf32>
      %cst_20 = arith.constant dense<0.000000e+00> : vector<1xf32>
      %34 = vector.multi_reduction <add>, %33, %cst_20 [1, 2] : vector<1x2x32xf32> to vector<1xf32>
      %35 = vector.shape_cast %34 : vector<1xf32> to vector<1x1x1xf32>
      %36 = vector.extract %35[0, 0, 0] : f32 from vector<1x1x1xf32>
      %cst_21 = arith.constant 0.0158730168 : f32
      %37 = arith.mulf %36, %cst_21 : f32
      %38 = math.sqrt %37 : f32
      %cst_22 = arith.constant 9.99999997E-7 : f32
      %39 = arith.addf %38, %cst_22 : f32
      %cst_23 = arith.constant 1.000000e+00 : f32
      %40 = arith.divf %cst_23, %39 : f32
      %41 = vector.broadcast %29 : f32 to vector<2x32xf32>
      %42 = arith.subf %24, %41 : vector<2x32xf32>
      %43 = vector.broadcast %40 : f32 to vector<2x32xf32>
      %44 = arith.mulf %42, %43 : vector<2x32xf32>
      %c0_24 = arith.constant 0 : index
      %c0_25 = arith.constant 0 : index
      %45 = vector.load %arg11[%c0_24, %c0_25] : memref<4x32xf32, #tpu.memory_space<vmem>>, vector<2x32xf32>
      tpu.vector_store %arg11[%c0_24, %c0_25], %44 {strides = array<i32>} : memref<4x32xf32, #tpu.memory_space<vmem>>, vector<2x32xf32>,
      %c0_26 = arith.constant 0 : index
      %c0_27 = arith.constant 0 : index
      %46 = vector.load %arg10[%c0_26, %c0_27] : memref<2x32xf32, #tpu.memory_space<vmem>>, vector<2x32xf32>
      %cst_28 = arith.constant 0.949999988 : f32
      %47 = vector.broadcast %cst_28 : f32 to vector<2x32xf32>
      %48 = arith.mulf %47, %46 : vector<2x32xf32>
      %cst_29 = arith.constant 5.000000e-02 : f32
      %49 = vector.broadcast %cst_29 : f32 to vector<2x32xf32>
      %50 = arith.mulf %49, %44 : vector<2x32xf32>
      %51 = arith.addf %48, %50 : vector<2x32xf32>
      %c2 = arith.constant 2 : index
      %c0_30 = arith.constant 0 : index
      %52 = vector.load %arg11[%c2, %c0_30] : memref<4x32xf32, #tpu.memory_space<vmem>>, vector<2x32xf32>
      tpu.vector_store %arg11[%c2, %c0_30], %51 {strides = array<i32>} : memref<4x32xf32, #tpu.memory_space<vmem>>, vector<2x32xf32>,
    } else {
    }
    return
  }
  func.func @transform_0(%arg0: i32) -> (i32, i32, i32, i32) {
    %c0_i32 = arith.constant 0 : i32
    %c0_i32_0 = arith.constant 0 : i32
    %c0_i32_1 = arith.constant 0 : i32
    %c0_i32_2 = arith.constant 0 : i32
    %c0_i32_3 = arith.constant 0 : i32
    return %c0_i32, %c0_i32_0, %c0_i32_1, %c0_i32_2 : i32, i32, i32, i32
  }
  func.func @transform_1(%arg0: i32) -> (i32, i32) {
    %c0_i32 = arith.constant 0 : i32
    %c0_i32_0 = arith.constant 0 : i32
    %c0_i32_1 = arith.constant 0 : i32
    return %c0_i32, %c0_i32_0 : i32, i32
  }
  func.func @transform_2(%arg0: i32) -> (i32, i32) {
    %c0_i32 = arith.constant 0 : i32
    %c0_i32_0 = arith.constant 0 : i32
    %c0_i32_1 = arith.constant 0 : i32
    return %c0_i32, %c0_i32_0 : i32, i32
  }
  func.func @transform_3(%arg0: i32) -> (i32, i32) {
    %c0_i32 = arith.constant 0 : i32
    %c0_i32_0 = arith.constant 0 : i32
    %c0_i32_1 = arith.constant 0 : i32
    return %c0_i32, %c0_i32_0 : i32, i32
  }
  func.func @transform_4(%arg0: i32) -> (i32, i32) {
    %c0_i32 = arith.constant 0 : i32
    %c0_i32_0 = arith.constant 0 : i32
    %c0_i32_1 = arith.constant 0 : i32
    return %c0_i32, %c0_i32_0 : i32, i32
  }
  func.func @transform_5(%arg0: i32) -> (i32, i32) {
    %c0_i32 = arith.constant 0 : i32
    %c0_i32_0 = arith.constant 0 : i32
    return %arg0, %c0_i32 : i32, i32
  }
  func.func @transform_6(%arg0: i32) -> (i32, i32) {
    %c0_i32 = arith.constant 0 : i32
    %c0_i32_0 = arith.constant 0 : i32
    %c0_i32_1 = arith.constant 0 : i32
    return %c0_i32, %c0_i32_0 : i32, i32
  }
  func.func @transform_7(%arg0: i32) -> (i32, i32) {
    %c0_i32 = arith.constant 0 : i32
    %c0_i32_0 = arith.constant 0 : i32
    %c0_i32_1 = arith.constant 0 : i32
    return %c0_i32, %c0_i32_0 : i32, i32
  }
  func.func @transform_8(%arg0: i32) -> (i32, i32) {
    %c0_i32 = arith.constant 0 : i32
    %c0_i32_0 = arith.constant 0 : i32
    %c0_i32_1 = arith.constant 0 : i32
    return %c0_i32, %c0_i32_0 : i32, i32
  }
  func.func @transform_9(%arg0: i32) -> (i32, i32) {
    %c0_i32 = arith.constant 0 : i32
    %c0_i32_0 = arith.constant 0 : i32
    %c0_i32_1 = arith.constant 0 : i32
    return %c0_i32, %c0_i32_0 : i32, i32
  }
  func.func @transform_10(%arg0: i32) -> (i32, i32) {
    %c0_i32 = arith.constant 0 : i32
    %c0_i32_0 = arith.constant 0 : i32
    %c0_i32_1 = arith.constant 0 : i32
    return %c0_i32, %c0_i32_0 : i32, i32
  }
  func.func @transform_11(%arg0: i32) -> (i32, i32, i32) {
    %c0_i32 = arith.constant 0 : i32
    %c0_i32_0 = arith.constant 0 : i32
    %c0_i32_1 = arith.constant 0 : i32
    %c0_i32_2 = arith.constant 0 : i32
    return %c0_i32, %c0_i32_0, %c0_i32_1 : i32, i32, i32
  }
}

</mosaic_0001>

<llo_original>
// kernel: tpu_custom_call.1
$region0: #{tpu_custom_call.1}
  #allocation0 [shape = 'u32[]', space=smem, size = 0x4, offset = 0x4, fixed_abs, tag = 'smem constant byte address 0x4 - core index']
  #allocation1 [shape = 'u32[144,128]{1,0:T(1,128)}', space=vmem, size = 0x12000, scoped, tag = 'internal scratch']
  #allocation2 [shape = 'f32[3,2,32]{2,1,0:T(2,128)}', space=vmem, size = 0xc00, scoped, tag = 'scratch operand']
  #allocation3 [shape = 'f32[2,64]{1,0:T(2,128)}', space=vmem, size = 0x400, scoped, tag = 'scratch operand']
  %s0 = inlined_call_operand.vmem [shape: f32[5,2,16,3], index: 0, kind: input, shape index: {}]
  %s1 = inlined_call_operand.vmem [shape: f32[3,32], index: 1, kind: input, shape index: {}]
  %s2 = inlined_call_operand.vmem [shape: f32[1,32], index: 2, kind: input, shape index: {}]
  %s3 = inlined_call_operand.vmem [shape: f32[3,32], index: 3, kind: input, shape index: {}]
  %s4 = inlined_call_operand.vmem [shape: f32[3,1], index: 4, kind: input, shape index: {}]
  %s5 = inlined_call_operand.vmem [shape: bf16[96,64], index: 5, kind: input, shape index: {}]
  %s6 = inlined_call_operand.vmem [shape: f32[1,64], index: 6, kind: input, shape index: {}]
  %s7 = inlined_call_operand.vmem [shape: bf16[64,32], index: 7, kind: input, shape index: {}]
  %s8 = inlined_call_operand.vmem [shape: f32[1,32], index: 8, kind: input, shape index: {}]
  %s9 = inlined_call_operand.vmem [shape: f32[2,32], index: 9, kind: input, shape index: {}]
  %s10 = inlined_call_operand.hbm [shape: f32[4,32], index: 10, kind: output, shape index: {0}]
  %s11 = inlined_call_operand.hbm [shape: f32[5,2,128], index: 11, kind: output, shape index: {1}]
  %12 = xla_tuple %s10, %s11
  %s13 = sld [smem:[#allocation0]]
  $region96: #{tpu_custom_call.1} parent=0
    _
  %s15 = ssub.s32 1, %s13
  %s16 = scalar_select 0, %s15, %s13
  $region1: #{tpu_custom_call.1} parent=0
    #allocation4 [shape = 'u8[2048]{0}', space=vmem, size = 0x800, scoped, tag = 'output window, operand 0, single buffered']
    #allocation5 [shape = 's32[2]{0}', space=sflag, size = 0x8, scoped, tag = 'scoped memory for tpu_custom_call.1']
    #allocation6 [shape = 'u8[5120]{0}', space=vmem, size = 0x1400, scoped, tag = 'output window, operand 1, single buffered']
    #allocation7 [shape = 's32[1]{0}', space=sflag, size = 0x4, scoped, tag = 'scoped memory for tpu_custom_call.1']
    %17 = vsyncpa [#allocation5], 0
    %18 = vsyncpa [#allocation7], 0
    loop: start=0, step=1, limit=5
    $region2: #{tpu_custom_call.1} parent=1 // loop_pre_header
      _
    $region3: #{tpu_custom_call.1} parent=1 // loop_header
      %s20 = sphi 0, %s24
      %p21 = scmp.ge.s32.totalorder %s20, 5
      %s28 = sphi 0, %s28
      %s30 = sphi 0, %s28
      %s31 = sphi 0, %s30
      %s45 = sphi 0, %s31
      %s49 = sphi 0, %s49
      %s51 = sphi 0, %s49
      %s52 = sphi 0, %s51
      %s66 = sphi 0, %s52
      %s70 = sphi 0, %s70
      %s72 = sphi 0, %s70
      %s73 = sphi 0, %s72
      %s87 = sphi 0, %s73
      %s91 = sphi 0, %s91
      %s93 = sphi 0, %s91
      %s94 = sphi 0, %s93
      %s108 = sphi 0, %s94
      %s112 = sphi 0, %s112
      %s114 = sphi 0, %s112
      %s115 = sphi 0, %s114
      %s129 = sphi 0, %s115
      %s135 = sphi 0, %s137
      %s138 = sphi 0, %s135
      %s139 = sphi 0, %s138
      %s155 = sphi 0, %s139
      %s159 = sphi 0, %s159
      %s161 = sphi 0, %s159
      %s162 = sphi 0, %s161
      %s176 = sphi 0, %s162
      %s180 = sphi 0, %s180
      %s182 = sphi 0, %s180
      %s183 = sphi 0, %s182
      %s197 = sphi 0, %s183
      %s201 = sphi 0, %s201
      %s203 = sphi 0, %s201
      %s204 = sphi 0, %s203
      %s218 = sphi 0, %s204
      %s222 = sphi 0, %s222
      %s224 = sphi 0, %s222
      %s225 = sphi 0, %s224
      %s239 = sphi 0, %s225
      %s243 = sphi 0, %s243
      %s245 = sphi 0, %s243
      %s246 = sphi 0, %s245
      %s260 = sphi 0, %s246
      %s264 = sphi 0, %s264
      %s266 = sphi 0, %s264
      %s267 = sphi 0, %s266
      %s281 = sphi 0, %s267
    $region4: #{tpu_custom_call.1} parent=1 // loop_header_branch
      %23 = sbr.rel (%p21) target = $region8
    $region5: #{tpu_custom_call.1} parent=1 // loop_body
      %s25 = ssub.s32 %s20, 1
      %s26 = ssub.s32 %s20, 2
      %s27 = sadd.s32 %s20, 1
      %s29 = sadd.s32 %s28, 1
      %p32 = scmp.eq.s32.totalorder %s20, 2
      %p33 = scmp.ne.s32.totalorder %s28, %s30
      %p34 = scmp.eq.s32.totalorder %s20, 0
      %p35 = por %p33, %p34
      %p36 = scmp.ne.s32.totalorder %s28, %s30
      %p37 = scmp.eq.s32.totalorder %s25, 2
      %p38 = por %p36, %p37
      %p39 = scmp.ne.s32.totalorder %s30, %s31
      %p40 = scmp.eq.s32.totalorder %s25, 0
      %p41 = por %p39, %p40
      %p42 = scmp.ne.s32.totalorder %s30, %s31
      %p43 = scmp.eq.s32.totalorder %s26, 2
      %p44 = por %p42, %p43
      %p46 = scmp.ne.s32.totalorder %s31, %s45
      %p47 = scmp.eq.s32.totalorder %s26, 0
      %p48 = por %p46, %p47
      %s50 = sadd.s32 %s49, 1
      %p53 = scmp.eq.s32.totalorder %s20, 2
      %p54 = scmp.ne.s32.totalorder %s49, %s51
      %p55 = scmp.eq.s32.totalorder %s20, 0
      %p56 = por %p54, %p55
      %p57 = scmp.ne.s32.totalorder %s49, %s51
      %p58 = scmp.eq.s32.totalorder %s25, 2
      %p59 = por %p57, %p58
      %p60 = scmp.ne.s32.totalorder %s51, %s52
      %p61 = scmp.eq.s32.totalorder %s25, 0
      %p62 = por %p60, %p61
      %p63 = scmp.ne.s32.totalorder %s51, %s52
      %p64 = scmp.eq.s32.totalorder %s26, 2
      %p65 = por %p63, %p64
      %p67 = scmp.ne.s32.totalorder %s52, %s66
      %p68 = scmp.eq.s32.totalorder %s26, 0
      %p69 = por %p67, %p68
      %s71 = sadd.s32 %s70, 1
      %p74 = scmp.eq.s32.totalorder %s20, 2
      %p75 = scmp.ne.s32.totalorder %s70, %s72
      %p76 = scmp.eq.s32.totalorder %s20, 0
      %p77 = por %p75, %p76
      %p78 = scmp.ne.s32.totalorder %s70, %s72
      %p79 = scmp.eq.s32.totalorder %s25, 2
      %p80 = por %p78, %p79
      %p81 = scmp.ne.s32.totalorder %s72, %s73
      %p82 = scmp.eq.s32.totalorder %s25, 0
      %p83 = por %p81, %p82
      %p84 = scmp.ne.s32.totalorder %s72, %s73
      %p85 = scmp.eq.s32.totalorder %s26, 2
      %p86 = por %p84, %p85
      %p88 = scmp.ne.s32.totalorder %s73, %s87
      %p89 = scmp.eq.s32.totalorder %s26, 0
      %p90 = por %p88, %p89
      %s92 = sadd.s32 %s91, 1
      %p95 = scmp.eq.s32.totalorder %s20, 2
      %p96 = scmp.ne.s32.totalorder %s91, %s93
      %p97 = scmp.eq.s32.totalorder %s20, 0
      %p98 = por %p96, %p97
      %p99 = scmp.ne.s32.totalorder %s91, %s93
      %p100 = scmp.eq.s32.totalorder %s25, 2
      %p101 = por %p99, %p100
      %p102 = scmp.ne.s32.totalorder %s93, %s94
      %p103 = scmp.eq.s32.totalorder %s25, 0
      %p104 = por %p102, %p103
      %p105 = scmp.ne.s32.totalorder %s93, %s94
      %p106 = scmp.eq.s32.totalorder %s26, 2
      %p107 = por %p105, %p106
      %p109 = scmp.ne.s32.totalorder %s94, %s108
      %p110 = scmp.eq.s32.totalorder %s26, 0
      %p111 = por %p109, %p110
      %s113 = sadd.s32 %s112, 1
      %p116 = scmp.eq.s32.totalorder %s20, 2
      %p117 = scmp.ne.s32.totalorder %s112, %s114
      %p118 = scmp.eq.s32.totalorder %s20, 0
      %p119 = por %p117, %p118
      %p120 = scmp.ne.s32.totalorder %s112, %s114
      %p121 = scmp.eq.s32.totalorder %s25, 2
      %p122 = por %p120, %p121
      %p123 = scmp.ne.s32.totalorder %s114, %s115
      %p124 = scmp.eq.s32.totalorder %s25, 0
      %p125 = por %p123, %p124
      %p126 = scmp.ne.s32.totalorder %s114, %s115
      %p127 = scmp.eq.s32.totalorder %s26, 2
      %p128 = por %p126, %p127
      %p130 = scmp.ne.s32.totalorder %s115, %s129
      %p131 = scmp.eq.s32.totalorder %s26, 0
      %p132 = por %p130, %p131
      %s133 = ssub.s32 %s20, %s27
      %p134 = scmp.eq.s32.totalorder %s133, 0
      %s136 = sadd.s32 %s135, 1
      %s137 = scalar_select %p134, %s135, %s136
      %p140 = pneg %p134
      %p141 = scmp.eq.s32.totalorder %s20, 2
      %p142 = por %p140, %p141
      %p143 = scmp.ne.s32.totalorder %s135, %s138
      %p144 = scmp.eq.s32.totalorder %s20, 0
      %p145 = por %p143, %p144
      %p146 = scmp.ne.s32.totalorder %s135, %s138
      %p147 = scmp.eq.s32.totalorder %s25, 2
      %p148 = por %p146, %p147
      %p149 = scmp.ne.s32.totalorder %s138, %s139
      %p150 = scmp.eq.s32.totalorder %s25, 0
      %p151 = por %p149, %p150
      %p152 = scmp.ne.s32.totalorder %s138, %s139
      %p153 = scmp.eq.s32.totalorder %s26, 2
      %p154 = por %p152, %p153
      %p156 = scmp.ne.s32.totalorder %s139, %s155
      %p157 = scmp.eq.s32.totalorder %s26, 0
      %p158 = por %p156, %p157
      %s160 = sadd.s32 %s159, 1
      %p163 = scmp.eq.s32.totalorder %s20, 2
      %p164 = scmp.ne.s32.totalorder %s159, %s161
      %p165 = scmp.eq.s32.totalorder %s20, 0
      %p166 = por %p164, %p165
      %p167 = scmp.ne.s32.totalorder %s159, %s161
      %p168 = scmp.eq.s32.totalorder %s25, 2
      %p169 = por %p167, %p168
      %p170 = scmp.ne.s32.totalorder %s161, %s162
      %p171 = scmp.eq.s32.totalorder %s25, 0
      %p172 = por %p170, %p171
      %p173 = scmp.ne.s32.totalorder %s161, %s162
      %p174 = scmp.eq.s32.totalorder %s26, 2
      %p175 = por %p173, %p174
      %p177 = scmp.ne.s32.totalorder %s162, %s176
      %p178 = scmp.eq.s32.totalorder %s26, 0
      %p179 = por %p177, %p178
      %s181 = sadd.s32 %s180, 1
      %p184 = scmp.eq.s32.totalorder %s20, 2
      %p185 = scmp.ne.s32.totalorder %s180, %s182
      %p186 = scmp.eq.s32.totalorder %s20, 0
      %p187 = por %p185, %p186
      %p188 = scmp.ne.s32.totalorder %s180, %s182
      %p189 = scmp.eq.s32.totalorder %s25, 2
      %p190 = por %p188, %p189
      %p191 = scmp.ne.s32.totalorder %s182, %s183
      %p192 = scmp.eq.s32.totalorder %s25, 0
      %p193 = por %p191, %p192
      %p194 = scmp.ne.s32.totalorder %s182, %s183
      %p195 = scmp.eq.s32.totalorder %s26, 2
      %p196 = por %p194, %p195
      %p198 = scmp.ne.s32.totalorder %s183, %s197
      %p199 = scmp.eq.s32.totalorder %s26, 0
      %p200 = por %p198, %p199
      %s202 = sadd.s32 %s201, 1
      %p205 = scmp.eq.s32.totalorder %s20, 2
      %p206 = scmp.ne.s32.totalorder %s201, %s203
      %p207 = scmp.eq.s32.totalorder %s20, 0
      %p208 = por %p206, %p207
      %p209 = scmp.ne.s32.totalorder %s201, %s203
      %p210 = scmp.eq.s32.totalorder %s25, 2
      %p211 = por %p209, %p210
      %p212 = scmp.ne.s32.totalorder %s203, %s204
      %p213 = scmp.eq.s32.totalorder %s25, 0
      %p214 = por %p212, %p213
      %p215 = scmp.ne.s32.totalorder %s203, %s204
      %p216 = scmp.eq.s32.totalorder %s26, 2
      %p217 = por %p215, %p216
      %p219 = scmp.ne.s32.totalorder %s204, %s218
      %p220 = scmp.eq.s32.totalorder %s26, 0
      %p221 = por %p219, %p220
      %s223 = sadd.s32 %s222, 1
      %p226 = scmp.eq.s32.totalorder %s20, 2
      %p227 = scmp.ne.s32.totalorder %s222, %s224
      %p228 = scmp.eq.s32.totalorder %s20, 0
      %p229 = por %p227, %p228
      %p230 = scmp.ne.s32.totalorder %s222, %s224
      %p231 = scmp.eq.s32.totalorder %s25, 2
      %p232 = por %p230, %p231
      %p233 = scmp.ne.s32.totalorder %s224, %s225
      %p234 = scmp.eq.s32.totalorder %s25, 0
      %p235 = por %p233, %p234
      %p236 = scmp.ne.s32.totalorder %s224, %s225
      %p237 = scmp.eq.s32.totalorder %s26, 2
      %p238 = por %p236, %p237
      %p240 = scmp.ne.s32.totalorder %s225, %s239
      %p241 = scmp.eq.s32.totalorder %s26, 0
      %p242 = por %p240, %p241
      %s244 = sadd.s32 %s243, 1
      %p247 = scmp.eq.s32.totalorder %s20, 2
      %p248 = scmp.ne.s32.totalorder %s243, %s245
      %p249 = scmp.eq.s32.totalorder %s20, 0
      %p250 = por %p248, %p249
      %p251 = scmp.ne.s32.totalorder %s243, %s245
      %p252 = scmp.eq.s32.totalorder %s25, 2
      %p253 = por %p251, %p252
      %p254 = scmp.ne.s32.totalorder %s245, %s246
      %p255 = scmp.eq.s32.totalorder %s25, 0
      %p256 = por %p254, %p255
      %p257 = scmp.ne.s32.totalorder %s245, %s246
      %p258 = scmp.eq.s32.totalorder %s26, 2
      %p259 = por %p257, %p258
      %p261 = scmp.ne.s32.totalorder %s246, %s260
      %p262 = scmp.eq.s32.totalorder %s26, 0
      %p263 = por %p261, %p262
      %s265 = sadd.s32 %s264, 1
      %p268 = scmp.eq.s32.totalorder %s20, 2
      %p269 = scmp.ne.s32.totalorder %s264, %s266
      %p270 = scmp.eq.s32.totalorder %s20, 0
      %p271 = por %p269, %p270
      %p272 = scmp.ne.s32.totalorder %s264, %s266
      %p273 = scmp.eq.s32.totalorder %s25, 2
      %p274 = por %p272, %p273
      %p275 = scmp.ne.s32.totalorder %s266, %s267
      %p276 = scmp.eq.s32.totalorder %s25, 0
      %p277 = por %p275, %p276
      %p278 = scmp.ne.s32.totalorder %s266, %s267
      %p279 = scmp.eq.s32.totalorder %s26, 2
      %p280 = por %p278, %p279
      %p282 = scmp.ne.s32.totalorder %s267, %s281
      %p283 = scmp.eq.s32.totalorder %s26, 0
      %p284 = por %p282, %p283
      %p285 = scmp.le.s32.totalorder 1, %s20
      %p286 = scmp.lt.s32.totalorder %s20, 4
      %p287 = pnand %p285, %p286
      %p288 = pneg %p287
      // Predicated region
      $region9: #{tpu_custom_call.1} parent=5 // pred_check
        _
      $region10: #{tpu_custom_call.1} parent=5 // pred_check_branch
        %290 = sbr.rel (%p287) target = $region12
      $region11: #{tpu_custom_call.1} parent=5 // pred_region
        %s291 = ssub.s32 %s20, 1
        // Predicated region
        $region13: #{tpu_custom_call.1} parent=11 // pred_check
          %p292 = pneg %p41
        $region14: #{tpu_custom_call.1} parent=11 // pred_check_branch
          %294 = sbr.rel (%p292) target = $region16
        $region15: #{tpu_custom_call.1} parent=11 // pred_region
          _
        $region16: #{tpu_custom_call.1} parent=11 // pred_fallthru
          _
        // Predicated region
        $region17: #{tpu_custom_call.1} parent=11 // pred_check
          %p295 = pneg %p62
        $region18: #{tpu_custom_call.1} parent=11 // pred_check_branch
          %297 = sbr.rel (%p295) target = $region20
        $region19: #{tpu_custom_call.1} parent=11 // pred_region
          _
        $region20: #{tpu_custom_call.1} parent=11 // pred_fallthru
          _
        // Predicated region
        $region21: #{tpu_custom_call.1} parent=11 // pred_check
          %p298 = pneg %p83
        $region22: #{tpu_custom_call.1} parent=11 // pred_check_branch
          %300 = sbr.rel (%p298) target = $region24
        $region23: #{tpu_custom_call.1} parent=11 // pred_region
          _
        $region24: #{tpu_custom_call.1} parent=11 // pred_fallthru
          _
        // Predicated region
        $region25: #{tpu_custom_call.1} parent=11 // pred_check
          %p301 = pneg %p104
        $region26: #{tpu_custom_call.1} parent=11 // pred_check_branch
          %303 = sbr.rel (%p301) target = $region28
        $region27: #{tpu_custom_call.1} parent=11 // pred_region
          _
        $region28: #{tpu_custom_call.1} parent=11 // pred_fallthru
          _
        // Predicated region
        $region29: #{tpu_custom_call.1} parent=11 // pred_check
          %p304 = pneg %p125
        $region30: #{tpu_custom_call.1} parent=11 // pred_check_branch
          %306 = sbr.rel (%p304) target = $region32
        $region31: #{tpu_custom_call.1} parent=11 // pred_region
          _
        $region32: #{tpu_custom_call.1} parent=11 // pred_fallthru
          _
        // Predicated region
        $region33: #{tpu_custom_call.1} parent=11 // pred_check
          %p307 = pneg %p172
        $region34: #{tpu_custom_call.1} parent=11 // pred_check_branch
          %309 = sbr.rel (%p307) target = $region36
        $region35: #{tpu_custom_call.1} parent=11 // pred_region
          _
        $region36: #{tpu_custom_call.1} parent=11 // pred_fallthru
          _
        // Predicated region
        $region37: #{tpu_custom_call.1} parent=11 // pred_check
          %p310 = pneg %p193
        $region38: #{tpu_custom_call.1} parent=11 // pred_check_branch
          %312 = sbr.rel (%p310) target = $region40
        $region39: #{tpu_custom_call.1} parent=11 // pred_region
          _
        $region40: #{tpu_custom_call.1} parent=11 // pred_fallthru
          _
        // Predicated region
        $region41: #{tpu_custom_call.1} parent=11 // pred_check
          %p313 = pneg %p214
        $region42: #{tpu_custom_call.1} parent=11 // pred_check_branch
          %315 = sbr.rel (%p313) target = $region44
        $region43: #{tpu_custom_call.1} parent=11 // pred_region
          _
        $region44: #{tpu_custom_call.1} parent=11 // pred_fallthru
          _
        // Predicated region
        $region45: #{tpu_custom_call.1} parent=11 // pred_check
          %p316 = pneg %p235
        $region46: #{tpu_custom_call.1} parent=11 // pred_check_branch
          %318 = sbr.rel (%p316) target = $region48
        $region47: #{tpu_custom_call.1} parent=11 // pred_region
          _
        $region48: #{tpu_custom_call.1} parent=11 // pred_fallthru
          _
      $region12: #{tpu_custom_call.1} parent=5 // pred_fallthru
        _
      %p319 = scmp.lt.s32.totalorder %s20, 3
      // Predicated region
      $region49: #{tpu_custom_call.1} parent=5 // pred_check
        %p320 = pneg %p319
      $region50: #{tpu_custom_call.1} parent=5 // pred_check_branch
        %322 = sbr.rel (%p320) target = $region52
      $region51: #{tpu_custom_call.1} parent=5 // pred_region
        // Predicated region
        $region53: #{tpu_custom_call.1} parent=51 // pred_check
          %p323 = pneg %p145
        $region54: #{tpu_custom_call.1} parent=51 // pred_check_branch
          %325 = sbr.rel (%p323) target = $region56
        $region55: #{tpu_custom_call.1} parent=51 // pred_region
          %s326 = smul.u32 4, %s20
          %p327 = scmp.lt.s32.totalorder %s326, 11
          %s328 = scalar_select %p327, %s326, 11
          %s329 = smul.addr %s328, 4
          %s330 = scalar_lea.vmem %s5, %s329
          %s331 = smul.u32 4, %s20
        $region56: #{tpu_custom_call.1} parent=51 // pred_fallthru
          _
      $region52: #{tpu_custom_call.1} parent=5 // pred_fallthru
        _
      %p332 = scmp.le.s32.totalorder 1, %s20
      %p333 = scmp.lt.s32.totalorder %s20, 4
      %p334 = pnand %p332, %p333
      %p335 = pneg %p334
      // Predicated region
      $region57: #{tpu_custom_call.1} parent=5 // pred_check
        _
      $region58: #{tpu_custom_call.1} parent=5 // pred_check_branch
        %337 = sbr.rel (%p334) target = $region60
      $region59: #{tpu_custom_call.1} parent=5 // pred_region
        %s338 = ssub.s32 %s20, 1
        %p339 = pneg %p41
        %p340 = pneg %p38
        %p341 = pneg %p62
        %p342 = pneg %p59
        %p343 = pneg %p83
        %p344 = pneg %p80
        %p345 = pneg %p104
        %p346 = pneg %p101
        %p347 = pneg %p125
        %p348 = pneg %p122
        %s349 = smul.u32 4, %s25
        %p350 = scmp.lt.s32.totalorder %s349, 11
        %s351 = scalar_select %p350, %s349, 11
        %s352 = smul.addr %s351, 4
        %s353 = scalar_lea.vmem %s5, %s352
        %p354 = pneg %p151
        %p355 = pneg %p148
        %p356 = pneg %p172
        %p357 = pneg %p169
        %p358 = pneg %p193
        %p359 = pneg %p190
        %p360 = pneg %p214
        %p361 = pneg %p211
        %p362 = pneg %p235
        %p363 = pneg %p232
        %p364 = pneg %p256
        %p365 = pneg %p253
        %p366 = pneg %p277
        %p367 = pneg %p274
        %s368 = smul.u32 4, %s25
        %p369 = scmp.lt.s32.totalorder %s368, 11
        %s370 = scalar_select %p369, %s368, 11
        %s371 = smul.addr %s370, 4
        %s372 = scalar_lea.vmem %s5, %s371
        %s373 = smul.u32 4, %s25
        %p375 = scmp.eq.s32.totalorder %s25, 0
        // Predicated region
        $region61: #{tpu_custom_call.1} parent=59 // pred_check
          %p376 = pneg %p375
        $region62: #{tpu_custom_call.1} parent=59 // pred_check_branch
          %378 = sbr.rel (%p376) target = $region64
        $region63: #{tpu_custom_call.1} parent=59 // pred_region
          %vm379 = vcmask 517120
          %380 = vst.msk [vmem:[#allocation3] sm:$0x3] %vm379, 0.0
          %v381 = vld [vmem:[%s1] sm:$0x7]
          %v382 = vld [vmem:[%s2] sm:$0x1]
          %v383 = vld [vmem:[%s3] sm:$0x1]
          %v384 = vld [vmem:[%s4] sm:$0x1]
          %v385 = vld [vmem:[%s0] sm:$0xff]
          %v386 = vld [vmem:[%s0 + $0x8] sm:$0xff]
          %v387 = vld [vmem:[%s0 + $0x10] sm:$0xff]
          %v388 = vld [vmem:[%s0 + $0x18] sm:$0xff]
          %390 = vset.pattern.permute.xlu0 0
          %391 = vperm.xlu0 %390, %v385
          %v392 = vpop.permute.xlu0 %391
          %395 = vset.pattern.permute.xlu0 0
          %396 = vperm.xlu0 %395, %v386
          %v397 = vpop.permute.xlu0 %396
          %400 = vset.pattern.permute.xlu0 0
          %401 = vperm.xlu0 %400, %v387
          %v402 = vpop.permute.xlu0 %401
          %405 = vset.pattern.permute.xlu0 0
          %406 = vperm.xlu0 %405, %v388
          %v407 = vpop.permute.xlu0 %406
          %v409 = vlaneseq
          %v410 = vshrl.u32 %v409, 7
          %v411 = vsub.s32 0, %v410
          %v412 = vrot.slane %v381, %v411
          %v413 = vmul.f32 %v392, %v412
          %v414 = vmul.f32 %v397, %v412
          %v415 = vmul.f32 %v402, %v412
          %v416 = vmul.f32 %v407, %v412
          %417 = vset.pattern.permute.xlu0 1
          %418 = vperm.xlu0 %417, %v385
          %v419 = vpop.permute.xlu0 %418
          %421 = vset.pattern.permute.xlu0 1
          %422 = vperm.xlu0 %421, %v386
          %v423 = vpop.permute.xlu0 %422
          %425 = vset.pattern.permute.xlu0 1
          %426 = vperm.xlu0 %425, %v387
          %v427 = vpop.permute.xlu0 %426
          %429 = vset.pattern.permute.xlu0 1
          %430 = vperm.xlu0 %429, %v388
          %v431 = vpop.permute.xlu0 %430
          %v433 = vlaneseq
          %v434 = vshrl.u32 %v433, 7
          %v435 = vsub.s32 1, %v434
          %v436 = vrot.slane %v381, %v435
          %v437 = vmul.f32 %v419, %v436
          %v438 = vmul.f32 %v423, %v436
          %v439 = vmul.f32 %v427, %v436
          %v440 = vmul.f32 %v431, %v436
          %v441 = vadd.f32 %v413, %v437
          %v442 = vadd.f32 %v414, %v438
          %v443 = vadd.f32 %v415, %v439
          %v444 = vadd.f32 %v416, %v440
          %445 = vset.pattern.permute.xlu0 2
          %446 = vperm.xlu0 %445, %v385
          %v447 = vpop.permute.xlu0 %446
          %449 = vset.pattern.permute.xlu0 2
          %450 = vperm.xlu0 %449, %v386
          %v451 = vpop.permute.xlu0 %450
          %453 = vset.pattern.permute.xlu0 2
          %454 = vperm.xlu0 %453, %v387
          %v455 = vpop.permute.xlu0 %454
          %457 = vset.pattern.permute.xlu0 2
          %458 = vperm.xlu0 %457, %v388
          %v459 = vpop.permute.xlu0 %458
          %v461 = vlaneseq
          %v462 = vshrl.u32 %v461, 7
          %v463 = vsub.s32 2, %v462
          %v464 = vrot.slane %v381, %v463
          %v465 = vmul.f32 %v447, %v464
          %v466 = vmul.f32 %v451, %v464
          %v467 = vmul.f32 %v455, %v464
          %v468 = vmul.f32 %v459, %v464
          %v469 = vadd.f32 %v441, %v465
          %v470 = vadd.f32 %v442, %v466
          %v471 = vadd.f32 %v443, %v467
          %v472 = vadd.f32 %v444, %v468
          %v474 = vlaneseq
          %v475 = vshrl.u32 %v474, 7
          %v476 = vsub.s32 0, %v475
          %v477 = vrot.slane %v382, %v476
          %v479 = vadd.f32 %v469, %v477
          %v480 = vadd.f32 %v470, %v477
          %v481 = vadd.f32 %v471, %v477
          %v482 = vadd.f32 %v472, %v477
          %v483 = vmax.f32 %v479, 0.0
          %v484 = vmax.f32 %v480, 0.0
          %v485 = vmax.f32 %v481, 0.0
          %v486 = vmax.f32 %v482, 0.0
          %v487 = vlaneseq
          %v488 = vshrl.u32 %v487, 7
          %v489 = vsub.s32 0, %v488
          %v490 = vrot.slane %v383, %v489
          %v491 = vmul.f32 %v483, %v490
          %v492 = vmul.f32 %v484, %v490
          %v493 = vmul.f32 %v485, %v490
          %v494 = vmul.f32 %v486, %v490
          %vm495 = vcmask 261120
          %v496 = vsel %vm495, %v491, 0.0
          %497 = vadd.xlane.f32.xlu0 %v496
          %v498 = vpop.xlane.xlu0 %497
          %v499 = vsel %vm495, %v492, 0.0
          %500 = vadd.xlane.f32.xlu0 %v499
          %v501 = vpop.xlane.xlu0 %500
          %v502 = vsel %vm495, %v493, 0.0
          %503 = vadd.xlane.f32.xlu0 %v502
          %v504 = vpop.xlane.xlu0 %503
          %v505 = vsel %vm495, %v494, 0.0
          %506 = vadd.xlane.f32.xlu0 %v505
          %v507 = vpop.xlane.xlu0 %506
          %v508 = vlaneseq
          %v509 = vshrl.u32 %v508, 7
          %v510 = vsub.s32 0, %v509
          %v511 = vrot.slane %v384, %v510
          %v512 = vadd.f32 %v498, %v511
          %v513 = vadd.f32 %v501, %v511
          %v514 = vadd.f32 %v504, %v511
          %v515 = vadd.f32 %v507, %v511
          %v516 = vxor.u32 %v512, 2147483648
          %v517 = vxor.u32 %v513, 2147483648
          %v518 = vxor.u32 %v514, 2147483648
          %v519 = vxor.u32 %v515, 2147483648
          %v520 = vmul.f32 %v516, 1.442695
          %v521 = vpow.pop %v520
          %v522 = vmul.f32 %v517, 1.442695
          %v523 = vpow.pop %v522
          %v524 = vmul.f32 %v518, 1.442695
          %v525 = vpow.pop %v524
          %v526 = vmul.f32 %v519, 1.442695
          %v527 = vpow.pop %v526
          %v528 = vadd.f32 %v521, 1.0
          %v529 = vadd.f32 %v523, 1.0
          %v530 = vadd.f32 %v525, 1.0
          %v531 = vadd.f32 %v527, 1.0
          %v532 = vrcp.pop %v528
          %v533 = vmul.f32 1.0, %v532
          %v534 = vrcp.pop %v529
          %v535 = vmul.f32 1.0, %v534
          %v536 = vrcp.pop %v530
          %v537 = vmul.f32 1.0, %v536
          %v538 = vrcp.pop %v531
          %v539 = vmul.f32 1.0, %v538
          %544 = vset.pattern.permute.xlu0 0
          %545 = vperm.xlu0 %544, %v533
          %v546 = vpop.permute.xlu0 %545
          %547 = vset.pattern.permute.xlu0 0
          %548 = vperm.xlu0 %547, %v535
          %v549 = vpop.permute.xlu0 %548
          %550 = vset.pattern.permute.xlu0 0
          %551 = vperm.xlu0 %550, %v537
          %v552 = vpop.permute.xlu0 %551
          %553 = vset.pattern.permute.xlu0 0
          %554 = vperm.xlu0 %553, %v539
          %v555 = vpop.permute.xlu0 %554
          %v556 = vlaneseq
          %v557 = vand.u32 %v556, 127
          %v558 = vlaneseq
          %v559 = vshrl.u32 %v558, 7
          %v560 = vsub.s32 %v557, %v559
          %v561 = vrot.slane %v546, %v560
          %v562 = vadd.s32 %v557, 4294967288
          %v563 = vlaneseq
          %v564 = vshrl.u32 %v563, 7
          %v565 = vsub.s32 %v562, %v564
          %v566 = vrot.slane %v549, %v565
          %vm567 = vcmask 130112
          %v568 = vsel %vm567, %v566, %v561
          %v569 = vlaneseq
          %v570 = vshrl.u32 %v569, 7
          %v571 = vsub.s32 %v557, %v570
          %v572 = vrot.slane %v552, %v571
          %v573 = vlaneseq
          %v574 = vshrl.u32 %v573, 7
          %v575 = vsub.s32 %v562, %v574
          %v576 = vrot.slane %v555, %v575
          %v577 = vsel %vm567, %v576, %v572
          %vm578 = vcmask 1041409
          %v579 = vsel %vm578, %v577, %v568
          %vm581 = vcmask 130048
          %v582 = vsel %vm581, %v579, 0.0
          %583 = vst [vmem:[#allocation6] sm:$0x3] %v582
          %v588 = vmul.f32 %v483, %v546
          %v589 = vmul.f32 %v484, %v549
          %v590 = vmul.f32 %v485, %v552
          %v591 = vmul.f32 %v486, %v555
          %v592 = vsel %vm495, %v588, 0.0
          %v593 = vsel %vm495, %v589, 0.0
          %v594 = vadd.f32 %v592, %v593
          %v595 = vrot.slane %v594, 4
          %v596 = vadd.f32 %v594, %v595
          %v597 = vrot.slane %v596, 2
          %v598 = vadd.f32 %v596, %v597
          %v599 = vrot.slane %v598, 1
          %v600 = vadd.f32 %v598, %v599
          %v601 = vsel %vm495, %v590, 0.0
          %v602 = vsel %vm495, %v591, 0.0
          %v603 = vadd.f32 %v601, %v602
          %v604 = vrot.slane %v603, 4
          %v605 = vadd.f32 %v603, %v604
          %v606 = vrot.slane %v605, 2
          %v607 = vadd.f32 %v605, %v606
          %v608 = vrot.slane %v607, 1
          %v609 = vadd.f32 %v607, %v608
          %v610 = vrcp.pop 16.0
          %v611 = vmul.f32 %v600, %v610
          %v612 = vmul.f32 %v609, %v610
          %v613 = vadd.f32 %v611, 0.0
          %v614 = vadd.f32 %v612, 0.0
          %v617 = vsel %vm578, %v614, %v613
          %vm619 = vcmask 254976
          %620 = vst.msk [vmem:[#allocation2] sm:$0x3] %vm619, %v617
          %v621 = vld [vmem:[%s3 + $0x1] sm:$0x1]
          %v622 = vld [vmem:[%s4 + $0x1] sm:$0x1]
          loop: start=0, step=1, limit=4
          $region65: #{tpu_custom_call.1} parent=63 // loop_pre_header
            _
          $region66: #{tpu_custom_call.1} parent=63 // loop_header
            %s624 = sphi 0, %s628
            %p625 = scmp.ge.s32.totalorder %s624, 4
            %v629 = vphi 0.0, %v838
            %v630 = vphi 0.0, %v839
          $region67: #{tpu_custom_call.1} parent=63 // loop_header_branch
            %627 = sbr.rel (%p625) target = $region71
          $region68: #{tpu_custom_call.1} parent=63 // loop_body
            %s631 = sadd.s32 %s624, 1
            %s632 = smul.u32 %s631, 32
            %s633 = scalar_lea.vmem %s0, %s632
            %v634 = vld [vmem:[%s633] sm:$0xff]
            %v635 = vld [vmem:[%s633 + $0x8] sm:$0xff]
            %v636 = vld [vmem:[%s633 + $0x10] sm:$0xff]
            %v637 = vld [vmem:[%s633 + $0x18] sm:$0xff]
            %639 = vset.pattern.permute.xlu0 0
            %640 = vperm.xlu0 %639, %v634
            %v641 = vpop.permute.xlu0 %640
            %644 = vset.pattern.permute.xlu0 0
            %645 = vperm.xlu0 %644, %v635
            %v646 = vpop.permute.xlu0 %645
            %649 = vset.pattern.permute.xlu0 0
            %650 = vperm.xlu0 %649, %v636
            %v651 = vpop.permute.xlu0 %650
            %654 = vset.pattern.permute.xlu0 0
            %655 = vperm.xlu0 %654, %v637
            %v656 = vpop.permute.xlu0 %655
            %v658 = vmul.f32 %v641, %v412
            %v659 = vmul.f32 %v646, %v412
            %v660 = vmul.f32 %v651, %v412
            %v661 = vmul.f32 %v656, %v412
            %662 = vset.pattern.permute.xlu0 1
            %663 = vperm.xlu0 %662, %v634
            %v664 = vpop.permute.xlu0 %663
            %666 = vset.pattern.permute.xlu0 1
            %667 = vperm.xlu0 %666, %v635
            %v668 = vpop.permute.xlu0 %667
            %670 = vset.pattern.permute.xlu0 1
            %671 = vperm.xlu0 %670, %v636
            %v672 = vpop.permute.xlu0 %671
            %674 = vset.pattern.permute.xlu0 1
            %675 = vperm.xlu0 %674, %v637
            %v676 = vpop.permute.xlu0 %675
            %v678 = vmul.f32 %v664, %v436
            %v679 = vmul.f32 %v668, %v436
            %v680 = vmul.f32 %v672, %v436
            %v681 = vmul.f32 %v676, %v436
            %v682 = vadd.f32 %v658, %v678
            %v683 = vadd.f32 %v659, %v679
            %v684 = vadd.f32 %v660, %v680
            %v685 = vadd.f32 %v661, %v681
            %686 = vset.pattern.permute.xlu0 2
            %687 = vperm.xlu0 %686, %v634
            %v688 = vpop.permute.xlu0 %687
            %690 = vset.pattern.permute.xlu0 2
            %691 = vperm.xlu0 %690, %v635
            %v692 = vpop.permute.xlu0 %691
            %694 = vset.pattern.permute.xlu0 2
            %695 = vperm.xlu0 %694, %v636
            %v696 = vpop.permute.xlu0 %695
            %698 = vset.pattern.permute.xlu0 2
            %699 = vperm.xlu0 %698, %v637
            %v700 = vpop.permute.xlu0 %699
            %v702 = vmul.f32 %v688, %v464
            %v703 = vmul.f32 %v692, %v464
            %v704 = vmul.f32 %v696, %v464
            %v705 = vmul.f32 %v700, %v464
            %v706 = vadd.f32 %v682, %v702
            %v707 = vadd.f32 %v683, %v703
            %v708 = vadd.f32 %v684, %v704
            %v709 = vadd.f32 %v685, %v705
            %v710 = vadd.f32 %v706, %v477
            %v711 = vadd.f32 %v707, %v477
            %v712 = vadd.f32 %v708, %v477
            %v713 = vadd.f32 %v709, %v477
            %v714 = vmax.f32 %v710, 0.0
            %v715 = vmax.f32 %v711, 0.0
            %v716 = vmax.f32 %v712, 0.0
            %v717 = vmax.f32 %v713, 0.0
            %v718 = vlaneseq
            %v719 = vshrl.u32 %v718, 7
            %v720 = vsub.s32 0, %v719
            %v721 = vrot.slane %v621, %v720
            %v722 = vmul.f32 %v714, %v721
            %v723 = vmul.f32 %v715, %v721
            %v724 = vmul.f32 %v716, %v721
            %v725 = vmul.f32 %v717, %v721
            %v726 = vsel %vm495, %v722, 0.0
            %727 = vadd.xlane.f32.xlu0 %v726
            %v728 = vpop.xlane.xlu0 %727
            %v729 = vsel %vm495, %v723, 0.0
            %730 = vadd.xlane.f32.xlu0 %v729
            %v731 = vpop.xlane.xlu0 %730
            %v732 = vsel %vm495, %v724, 0.0
            %733 = vadd.xlane.f32.xlu0 %v732
            %v734 = vpop.xlane.xlu0 %733
            %v735 = vsel %vm495, %v725, 0.0
            %736 = vadd.xlane.f32.xlu0 %v735
            %v737 = vpop.xlane.xlu0 %736
            %v738 = vlaneseq
            %v739 = vshrl.u32 %v738, 7
            %v740 = vsub.s32 0, %v739
            %v741 = vrot.slane %v622, %v740
            %v742 = vadd.f32 %v728, %v741
            %v743 = vadd.f32 %v731, %v741
            %v744 = vadd.f32 %v734, %v741
            %v745 = vadd.f32 %v737, %v741
            %v746 = vxor.u32 %v742, 2147483648
            %v747 = vxor.u32 %v743, 2147483648
            %v748 = vxor.u32 %v744, 2147483648
            %v749 = vxor.u32 %v745, 2147483648
            %v750 = vmul.f32 %v746, 1.442695
            %v751 = vpow.pop %v750
            %v752 = vmul.f32 %v747, 1.442695
            %v753 = vpow.pop %v752
            %v754 = vmul.f32 %v748, 1.442695
            %v755 = vpow.pop %v754
            %v756 = vmul.f32 %v749, 1.442695
            %v757 = vpow.pop %v756
            %v758 = vadd.f32 %v751, 1.0
            %v759 = vadd.f32 %v753, 1.0
            %v760 = vadd.f32 %v755, 1.0
            %v761 = vadd.f32 %v757, 1.0
            %v762 = vrcp.pop %v758
            %v763 = vmul.f32 1.0, %v762
            %v764 = vrcp.pop %v759
            %v765 = vmul.f32 1.0, %v764
            %v766 = vrcp.pop %v760
            %v767 = vmul.f32 1.0, %v766
            %v768 = vrcp.pop %v761
            %v769 = vmul.f32 1.0, %v768
            %774 = vset.pattern.permute.xlu0 0
            %775 = vperm.xlu0 %774, %v763
            %v776 = vpop.permute.xlu0 %775
            %777 = vset.pattern.permute.xlu0 0
            %778 = vperm.xlu0 %777, %v765
            %v779 = vpop.permute.xlu0 %778
            %780 = vset.pattern.permute.xlu0 0
            %781 = vperm.xlu0 %780, %v767
            %v782 = vpop.permute.xlu0 %781
            %783 = vset.pattern.permute.xlu0 0
            %784 = vperm.xlu0 %783, %v769
            %v785 = vpop.permute.xlu0 %784
            %v786 = vlaneseq
            %v787 = vshrl.u32 %v786, 7
            %v788 = vsub.s32 %v557, %v787
            %v789 = vrot.slane %v776, %v788
            %v790 = vlaneseq
            %v791 = vshrl.u32 %v790, 7
            %v792 = vsub.s32 %v562, %v791
            %v793 = vrot.slane %v779, %v792
            %v794 = vsel %vm567, %v793, %v789
            %v795 = vlaneseq
            %v796 = vshrl.u32 %v795, 7
            %v797 = vsub.s32 %v557, %v796
            %v798 = vrot.slane %v782, %v797
            %v799 = vlaneseq
            %v800 = vshrl.u32 %v799, 7
            %v801 = vsub.s32 %v562, %v800
            %v802 = vrot.slane %v785, %v801
            %v803 = vsel %vm567, %v802, %v798
            %v804 = vsel %vm578, %v803, %v794
            %v806 = vsel %vm581, %v804, 0.0
            %s807 = smul.u32 %s631, 2
            %s808 = scalar_lea.vmem [#allocation6], %s807
            %809 = vst [vmem:[%s808] sm:$0x3] %v806
            %v814 = vmul.f32 %v714, %v776
            %v815 = vmul.f32 %v715, %v779
            %v816 = vmul.f32 %v716, %v782
            %v817 = vmul.f32 %v717, %v785
            %v818 = vsel %vm495, %v814, 0.0
            %v819 = vsel %vm495, %v815, 0.0
            %v820 = vadd.f32 %v818, %v819
            %v821 = vrot.slane %v820, 4
            %v822 = vadd.f32 %v820, %v821
            %v823 = vrot.slane %v822, 2
            %v824 = vadd.f32 %v822, %v823
            %v825 = vrot.slane %v824, 1
            %v826 = vadd.f32 %v824, %v825
            %v827 = vsel %vm495, %v816, 0.0
            %v828 = vsel %vm495, %v817, 0.0
            %v829 = vadd.f32 %v827, %v828
            %v830 = vrot.slane %v829, 4
            %v831 = vadd.f32 %v829, %v830
            %v832 = vrot.slane %v831, 2
            %v833 = vadd.f32 %v831, %v832
            %v834 = vrot.slane %v833, 1
            %v835 = vadd.f32 %v833, %v834
            %v836 = vmul.f32 %v826, %v610
            %v837 = vmul.f32 %v835, %v610
            %v838 = vadd.f32 %v629, %v836
            %v839 = vadd.f32 %v630, %v837
          $region69: #{tpu_custom_call.1} parent=63 // loop_footer
            %s628 = sadd.s32 1, %s624
          $region70: #{tpu_custom_call.1} parent=63 // loop_footer_branch
            %623 = sbr.rel target = $region66
          $region71: #{tpu_custom_call.1} parent=63 // loop_exit
            _
          %v840 = vmul.f32 %v629, 0.25
          %v841 = vmul.f32 %v630, 0.25
          %v844 = vsel %vm578, %v841, %v840
          %s846 = scalar_lea.vmem [#allocation2], 2
          %847 = vst.msk [vmem:[%s846] sm:$0x3] %vm619, %v844
          %s848 = scalar_lea.vmem [#allocation2], 4
          %849 = vst.msk [vmem:[%s848] sm:$0x3] %vm619, 0.0
        $region64: #{tpu_custom_call.1} parent=59 // pred_fallthru
          _
        %v850 = vld [vmem:[#allocation3] sm:$0x3]
        %s851 = smul.u32 %s25, 2
        %s852 = scalar_lea.vmem [#allocation2], %s851
        %v853 = vld [vmem:[%s852] sm:$0x3]
        %v854 = vpack.c.bf16 %v853, %v853
        %v855 = vld [vmem:[%s372] sm:$0xf]
        %v856 = vld [vmem:[%s372 + $0x4] sm:$0xf]
        %v857 = vld [vmem:[%s372 + $0x8] sm:$0xf]
        %v858 = vld [vmem:[%s372 + $0xc] sm:$0xf]
        %v863 = vunpack.c.l.b16 %v855
        %v864 = vunpack.c.l.b16 %v856
        %v865 = vunpack.c.l.b16 %v857
        %v866 = vunpack.c.l.b16 %v858
        %v867 = vpack.c.b16 %v864, %v863
        %v868 = vpack.c.b16 %v866, %v865
        %vm871 = vcmask 261120
        %v873 = vsel %vm871, %v854, 0
        %875 = vmatprep.subr.bf16.mxu0 0
        %876 = vmatpush1.bf16.msra.mxu0 %v867
        %877 = vmatprep.subr.bf16.mxu0 0
        %878 = vmatpush1.bf16.msra.mxu0 %v868
        %879 = vmatprep.subr.bf16.mxu0 0
        %880 = vmatpush1.bf16.msra.mxu0 0
        %881 = vmatprep.subr.bf16.mxu0 0
        %882 = vmatpush1.bf16.msra.mxu0 0
        %883 = vmatprep.subr.bf16.mxu0 0
        %884 = vmatpush1.bf16.msra.mxu0 0
        %885 = vmatprep.subr.bf16.mxu0 0
        %886 = vmatpush1.bf16.msra.mxu0 0
        %887 = vmatprep.subr.bf16.mxu0 0
        %888 = vmatpush1.bf16.msra.mxu0 0
        %889 = vmatprep.subr.bf16.mxu0 0
        %890 = vmatpush1.bf16.msra.mxu0 0
        %891 = vmatprep.subr.bf16.mxu0 0
        %892 = vmatpush1.bf16.msra.mxu0 0
        %893 = vmatprep.subr.bf16.mxu0 0
        %894 = vmatpush1.bf16.msra.mxu0 0
        %895 = vmatprep.subr.bf16.mxu0 0
        %896 = vmatpush1.bf16.msra.mxu0 0
        %897 = vmatprep.subr.bf16.mxu0 0
        %898 = vmatpush1.bf16.msra.mxu0 0
        %899 = vmatprep.subr.bf16.mxu0 0
        %900 = vmatpush1.bf16.msra.mxu0 0
        %901 = vmatprep.subr.bf16.mxu0 0
        %902 = vmatpush1.bf16.msra.mxu0 0
        %903 = vmatprep.subr.bf16.mxu0 0
        %904 = vmatpush1.bf16.msra.mxu0 0
        %905 = vmatprep.subr.bf16.mxu0 0
        %906 = vmatpush1.bf16.msra.mxu0 0
        %907 = vmatprep.mubr.bf16.mxu0 0
        %908 = vmatmul.mubr.bf16.gmra.mrb[0].mxu0 %v873
        %v909 = vpop.f32.mrb[0].mxu0
        %v910 = vadd.f32 0.0, %v909
        %v911 = vpop.f32.mrb[0].mxu0
        %v912 = vpop.f32.mrb[0].mxu0
        %v913 = vpop.f32.mrb[0].mxu0
        %914 = vdwg.mxu0
        %v915 = vadd.f32 %v850, %v910
        %vm916 = vcmask 517120
        %917 = vst.msk [vmem:[#allocation3] sm:$0x3] %vm916, %v915
        %p918 = scmp.eq.s32.totalorder %s25, 2
        // Predicated region
        $region72: #{tpu_custom_call.1} parent=59 // pred_check
          %p919 = pneg %p918
        $region73: #{tpu_custom_call.1} parent=59 // pred_check_branch
          %921 = sbr.rel (%p919) target = $region75
        $region74: #{tpu_custom_call.1} parent=59 // pred_region
          %v922 = vld [vmem:[#allocation3] sm:$0x3]
          %v923 = vld [vmem:[%s6] sm:$0x1]
          %v925 = vlaneseq
          %v926 = vshrl.u32 %v925, 7
          %v927 = vsub.s32 0, %v926
          %v928 = vrot.slane %v923, %v927
          %v930 = vadd.f32 %v922, %v928
          %v931 = vpack.c.bf16 %v930, %v930
          %v932 = vld [vmem:[%s7] sm:$0xf]
          %v933 = vld [vmem:[%s7 + $0x4] sm:$0xf]
          %v934 = vld [vmem:[%s7 + $0x8] sm:$0xf]
          %v935 = vld [vmem:[%s7 + $0xc] sm:$0xf]
          %v936 = vld [vmem:[%s7 + $0x10] sm:$0xf]
          %v937 = vld [vmem:[%s7 + $0x14] sm:$0xf]
          %v938 = vld [vmem:[%s7 + $0x18] sm:$0xf]
          %v939 = vld [vmem:[%s7 + $0x1c] sm:$0xf]
          %v940 = vld [vmem:[%s8] sm:$0x1]
          %v942 = vlaneseq
          %v943 = vshrl.u32 %v942, 7
          %v944 = vsub.s32 0, %v943
          %v945 = vrot.slane %v940, %v944
          %v955 = vunpack.c.l.b16 %v932
          %v956 = vunpack.c.l.b16 %v933
          %v957 = vunpack.c.l.b16 %v934
          %v958 = vunpack.c.l.b16 %v935
          %v959 = vunpack.c.l.b16 %v936
          %v960 = vunpack.c.l.b16 %v937
          %v961 = vunpack.c.l.b16 %v938
          %v962 = vunpack.c.l.b16 %v939
          %v963 = vpack.c.b16 %v956, %v955
          %v964 = vpack.c.b16 %v958, %v957
          %v965 = vpack.c.b16 %v960, %v959
          %v966 = vpack.c.b16 %v962, %v961
          %vm971 = vcmask 523264
          %v973 = vsel %vm971, %v931, 0
          %975 = vmatprep.subr.bf16.mxu0 0
          %976 = vmatpush1.bf16.msra.mxu0 %v963
          %977 = vmatprep.subr.bf16.mxu0 0
          %978 = vmatpush1.bf16.msra.mxu0 %v964
          %979 = vmatprep.subr.bf16.mxu0 0
          %980 = vmatpush1.bf16.msra.mxu0 %v965
          %981 = vmatprep.subr.bf16.mxu0 0
          %982 = vmatpush1.bf16.msra.mxu0 %v966
          %983 = vmatprep.subr.bf16.mxu0 0
          %984 = vmatpush1.bf16.msra.mxu0 0
          %985 = vmatprep.subr.bf16.mxu0 0
          %986 = vmatpush1.bf16.msra.mxu0 0
          %987 = vmatprep.subr.bf16.mxu0 0
          %988 = vmatpush1.bf16.msra.mxu0 0
          %989 = vmatprep.subr.bf16.mxu0 0
          %990 = vmatpush1.bf16.msra.mxu0 0
          %991 = vmatprep.subr.bf16.mxu0 0
          %992 = vmatpush1.bf16.msra.mxu0 0
          %993 = vmatprep.subr.bf16.mxu0 0
          %994 = vmatpush1.bf16.msra.mxu0 0
          %995 = vmatprep.subr.bf16.mxu0 0
          %996 = vmatpush1.bf16.msra.mxu0 0
          %997 = vmatprep.subr.bf16.mxu0 0
          %998 = vmatpush1.bf16.msra.mxu0 0
          %999 = vmatprep.subr.bf16.mxu0 0
          %1000 = vmatpush1.bf16.msra.mxu0 0
          %1001 = vmatprep.subr.bf16.mxu0 0
          %1002 = vmatpush1.bf16.msra.mxu0 0
          %1003 = vmatprep.subr.bf16.mxu0 0
          %1004 = vmatpush1.bf16.msra.mxu0 0
          %1005 = vmatprep.subr.bf16.mxu0 0
          %1006 = vmatpush1.bf16.msra.mxu0 0
          %1007 = vmatprep.mubr.bf16.mxu0 0
          %1008 = vmatmul.mubr.bf16.gmra.mrb[0].mxu0 %v973
          %v1009 = vpop.f32.mrb[0].mxu0
          %v1010 = vadd.f32 %v945, %v1009
          %v1011 = vpop.f32.mrb[0].mxu0
          %v1012 = vpop.f32.mrb[0].mxu0
          %v1013 = vpop.f32.mrb[0].mxu0
          %1014 = vdwg.mxu0
          %vm1015 = vcmask 254976
          %v1016 = vsel %vm1015, %v1010, 0.0
          %1017 = vadd.xlane.f32.xlu0 %v1016
          %v1018 = vpop.xlane.xlu0 %1017
          %v1019 = vrot.slane %v1018, 4
          %v1020 = vadd.f32 %v1018, %v1019
          %v1021 = vrot.slane %v1020, 2
          %v1022 = vadd.f32 %v1020, %v1021
          %v1023 = vrot.slane %v1022, 1
          %v1024 = vadd.f32 %v1022, %v1023
          %s1025 = vtos %v1024
          %s1026 = smul.f32 %s1025, 0.015625
          %v1027 = vstv %s1026
          %v1028 = vsub.f32 %v1010, %v1027
          %v1029 = vmul.f32 %v1028, %v1028
          %v1030 = vsel %vm1015, %v1029, 0.0
          %1031 = vadd.xlane.f32.xlu0 %v1030
          %v1032 = vpop.xlane.xlu0 %1031
          %v1033 = vrot.slane %v1032, 4
          %v1034 = vadd.f32 %v1032, %v1033
          %v1035 = vrot.slane %v1034, 2
          %v1036 = vadd.f32 %v1034, %v1035
          %v1037 = vrot.slane %v1036, 1
          %v1038 = vadd.f32 %v1036, %v1037
          %s1039 = vtos %v1038
          %s1040 = smul.f32 %s1039, 0.015873017
          %v1041 = vstv %s1040
          %v1042 = vrsqrt.pop %v1041
          %v1043 = vmul.f32 %v1041, %v1042
          %vm1044 = vcmp.eq.f32.partialorder %v1041, inf
          %v1045 = vsel %vm1044, %v1041, %v1043
          %vm1046 = vcmp.eq.f32.partialorder %v1041, 0.0
          %v1047 = vand.u32 %v1041, 2147483648
          %v1048 = vsel %vm1046, %v1047, %v1045
          %s1049 = vtos %v1048
          %s1050 = sadd.f32 %s1049, 1e-06
          %v1051 = vstv %s1050
          %v1052 = vrcp.pop %v1051
          %s1053 = vtos %v1052
          %v1054 = vstv %s1053
          %v1055 = vmul.f32 %v1028, %v1054
          %1056 = vst.msk [vmem:[#allocation4] sm:$0x3] %vm1015, %v1055
          %v1057 = vld [vmem:[%s9] sm:$0x3]
          %v1058 = vmul.f32 %v1057, 0.95
          %v1059 = vmul.f32 %v1055, 0.05
          %v1060 = vadd.f32 %v1058, %v1059
          %1061 = vst.msk [vmem:[#allocation4 + $0x2] sm:$0x3] %vm1015, %v1060
        $region75: #{tpu_custom_call.1} parent=59 // pred_fallthru
          _
        // Predicated region
        $region76: #{tpu_custom_call.1} parent=59 // pred_check
          %p1062 = pneg %p253
        $region77: #{tpu_custom_call.1} parent=59 // pred_check_branch
          %1064 = sbr.rel (%p1062) target = $region79
        $region78: #{tpu_custom_call.1} parent=59 // pred_region
          %s1066 = ssub.s32 64, 64
          %1067 = vsyncadd [#allocation5], %s1066
          %s1069 = sshll.u32 [#allocation4], 4
          %s1070 = int_to_ptr.vmem [resolvable:$true] %s1069
          %1072 = dma.vmem_to_hbm [thread:$0]  %s1070, 64, %s10, [#allocation5]
        $region79: #{tpu_custom_call.1} parent=59 // pred_fallthru
          _
        // Predicated region
        $region80: #{tpu_custom_call.1} parent=59 // pred_check
          %p1073 = pneg %p274
        $region81: #{tpu_custom_call.1} parent=59 // pred_check_branch
          %1075 = sbr.rel (%p1073) target = $region83
        $region82: #{tpu_custom_call.1} parent=59 // pred_region
          %s1077 = ssub.s32 160, 160
          %1078 = vsyncadd [#allocation7], %s1077
          %s1079 = sshll.u32 [#allocation6], 4
          %s1080 = int_to_ptr.vmem [resolvable:$true] %s1079
          %1085 = dma.vmem_to_hbm [thread:$0]  %s1080, 160, %s11, [#allocation7], 32, 32, 2
        $region83: #{tpu_custom_call.1} parent=59 // pred_fallthru
          _
        // Predicated region
        $region84: #{tpu_custom_call.1} parent=59 // pred_check
          %p1086 = pneg %p253
        $region85: #{tpu_custom_call.1} parent=59 // pred_check_branch
          %1088 = sbr.rel (%p1086) target = $region87
        $region86: #{tpu_custom_call.1} parent=59 // pred_region
          %1089 = dma.done [#allocation5], 64
        $region87: #{tpu_custom_call.1} parent=59 // pred_fallthru
          _
        // Predicated region
        $region88: #{tpu_custom_call.1} parent=59 // pred_check
          %p1090 = pneg %p274
        $region89: #{tpu_custom_call.1} parent=59 // pred_check_branch
          %1092 = sbr.rel (%p1090) target = $region91
        $region90: #{tpu_custom_call.1} parent=59 // pred_region
          %1093 = dma.done [#allocation7], 160
        $region91: #{tpu_custom_call.1} parent=59 // pred_fallthru
          _
      $region60: #{tpu_custom_call.1} parent=5 // pred_fallthru
        _
      %p1094 = scmp.le.s32.totalorder 2, %s20
      // Predicated region
      $region92: #{tpu_custom_call.1} parent=5 // pred_check
        %p1095 = pneg %p1094
      $region93: #{tpu_custom_call.1} parent=5 // pred_check_branch
        %1097 = sbr.rel (%p1095) target = $region95
      $region94: #{tpu_custom_call.1} parent=5 // pred_region
        %s1098 = ssub.s32 %s20, 2
      $region95: #{tpu_custom_call.1} parent=5 // pred_fallthru
        _
    $region6: #{tpu_custom_call.1} parent=1 // loop_footer
      %s24 = sadd.s32 1, %s20
    $region7: #{tpu_custom_call.1} parent=1 // loop_footer_branch
      %19 = sbr.rel target = $region3
    $region8: #{tpu_custom_call.1} parent=1 // loop_exit
      _
    %1099 = vsyncpa [#allocation5], 1
    %s1100 = scalar_lea.sflag [#allocation5], 1
    %1101 = vsyncpa %s1100, 1
    %1102 = vsyncpa [#allocation7], 1

</llo_original>
